<compile_context>
chip_gen: v7x
topology: tpu7x:2x2x1
jax: 0.10.0
libtpu: 0.0.40
codegen_flags: <defaults>
</compile_context>

<pallas_src>
import functools

import jax
import jax.numpy as jnp
from jax import lax
from jax.experimental import pallas as pl
from jax.experimental.pallas import tpu as pltpu

EPS = 1e-5
LANE = 128                      # lane-dense channel padding target
_BLOCK_BUDGET = 6 * 1024 * 1024  # per-block byte budget used when picking row blocks


# --------------------------------------------------------------------------
# small helpers
# --------------------------------------------------------------------------
def _vmem_limit_bytes():
    # Generation-aware scoped-VMEM budget: ~5/8 of physical VMEM
    # (v7x: 64 MiB -> 40 MiB, v5e/v6e: 128 MiB -> 80 MiB), safe fallback otherwise.
    cap = 64 * 1024 * 1024
    try:
        info = pltpu.get_tpu_info()
        c = getattr(info, "vmem_capacity_bytes", None)
        if c:
            cap = int(c)
    except Exception:
        pass
    return max(32 * 1024 * 1024, min((cap * 5) // 8, 100 * 1024 * 1024))


_VMEM_LIMIT = _vmem_limit_bytes()


def _cparams(sem):
    return pltpu.CompilerParams(dimension_semantics=sem,
                                vmem_limit_bytes=_VMEM_LIMIT)


def _ceil_to(n, m):
    return ((n + m - 1) // m) * m


def _pad_axis(a, axis, target):
    pad = target - a.shape[axis]
    if pad <= 0:
        return a
    cfg = [(0, 0)] * a.ndim
    cfg[axis] = (0, pad)
    return jnp.pad(a, cfg)


def _row_block(h, stride=1, row_bytes=0, budget=_BLOCK_BUDGET):
    # largest row block (from a preferred list) that divides h, is a multiple of the
    # stride, and fits the per-block byte budget; fall back to the smallest valid one.
    cands = [rb for rb in (32, 16, 8, 4, 2, 1) if h % rb == 0 and rb % stride == 0]
    if not cands:
        return h
    for rb in cands:
        if rb * row_bytes <= budget:
            return rb
    return cands[-1]


def _bn_fold_from_sums(sums, count, gamma, beta):
    # sums: (N, HB, 2, C) per-tile [sum, sum_sq] partials emitted by K1/K2, computed
    # from the bf16-rounded activations (consistent with what the next kernel reads).
    s = jnp.sum(sums.astype(jnp.float32), axis=(0, 1))      # (2, C)
    mean = s[0] / count
    var = jnp.maximum(s[1] / count - mean * mean, 0.0)       # biased var (torch training BN)
    scale = gamma / jnp.sqrt(var + EPS)
    bias = beta - mean * scale
    c = gamma.shape[0]
    return (scale.reshape(1, 1, 1, c).astype(jnp.float32),
            bias.reshape(1, 1, 1, c).astype(jnp.float32))


# --------------------------------------------------------------------------
# K1: h = relu(bn1(x));  out1 = h @ W1 ; ds = downsample(h)
#     stride==1 & wds: fused single matmul against [W1 | Wds]
#     stride>1:        split — Wds only on the stride-selected pixels
#     identity ds:     ds = h (no matmul)
# --------------------------------------------------------------------------
def _k1_kernel(stride, p, identity_ds, x_ref, s_ref, b_ref, w_ref,
               out1_ref, ds_ref, sums_ref):
    x = x_ref[...].astype(jnp.float32)                       # (1, RB, W, CIN)
    _, rb, wd, cin = x.shape
    rbd, wo = ds_ref.shape[1], ds_ref.shape[2]

    h = jnp.maximum(x * s_ref[...] + b_ref[...], 0.0)        # (1, RB, W, CIN)
    h2 = h.reshape(rb * wd, cin).astype(jnp.bfloat16)

    if identity_ds:
        y1 = jnp.dot(h2, w_ref[...], preferred_element_type=jnp.float32)
        ds = h.astype(ds_ref.dtype)                          # cin == expansion*planes
    elif stride == 1:
        y = jnp.dot(h2, w_ref[...], preferred_element_type=jnp.float32)
        y1 = y[:, :p]
        ds = y[:, p:].reshape(1, rb, wd, -1).astype(ds_ref.dtype)
    else:
        y1 = jnp.dot(h2, w_ref[:, :p], preferred_element_type=jnp.float32)
        # downsample only on the stride-selected pixels -> no wasted MXU flops
        hs = h[0, ::stride, ::stride, :].reshape(rbd * wo, cin).astype(jnp.bfloat16)
        ds = jnp.dot(hs, w_ref[:, p:], preferred_element_type=jnp.float32)
        ds = ds.reshape(1, rbd, wo, -1).astype(ds_ref.dtype)

    y1b = y1.astype(out1_ref.dtype)                          # bf16 round once
    y1f = y1b.astype(jnp.float32)
    sums_ref[...] = jnp.concatenate(
        [jnp.sum(y1f, axis=0, keepdims=True),
         jnp.sum(y1f * y1f, axis=0, keepdims=True)],
        axis=0).reshape(1, 1, 2, p)
    out1_ref[...] = y1b.reshape(1, rb, wd, p)
    ds_ref[...] = ds


def _k1_call(x, scale, bias, w, p_out, c4, stride, identity_ds):
    n, H, W, cin = x.shape
    row_bytes = 4 * W * (cin + p_out + c4)
    RB = _row_block(H, stride, row_bytes)
    HB = H // RB
    HO, WO = H // stride, W // stride
    RBd = RB // stride
    kern = functools.partial(_k1_kernel, stride, p_out, identity_ds)
    return pl.pallas_call(
        kern,
        grid=(n, HB),
        in_specs=[
            pl.BlockSpec((1, RB, W, cin), lambda i, r: (i, r, 0, 0)),
            pl.BlockSpec((1, 1, 1, cin), lambda i, r: (0, 0, 0, 0)),
            pl.BlockSpec((1, 1, 1, cin), lambda i, r: (0, 0, 0, 0)),
            pl.BlockSpec(w.shape, lambda i, r: (0, 0)),
        ],
        out_specs=(
            pl.BlockSpec((1, RB, W, p_out), lambda i, r: (i, r, 0, 0)),
            pl.BlockSpec((1, RBd, WO, c4), lambda i, r: (i, r, 0, 0)),
            pl.BlockSpec((1, 1, 2, p_out), lambda i, r: (i, r, 0, 0)),
        ),
        out_shape=(
            jax.ShapeDtypeStruct((n, H, W, p_out), jnp.bfloat16),
            jax.ShapeDtypeStruct((n, HO, WO, c4), jnp.bfloat16),
            jax.ShapeDtypeStruct((n, HB, 2, p_out), jnp.float32),
        ),
        compiler_params=_cparams(("parallel", "parallel")),
    )(x, scale, bias, w)


# --------------------------------------------------------------------------
# K2: h = relu(bn2(out1));  out2 = conv3x3(h, W2, stride, padding=1)
#     per-row-block bf16 halo slab built from the resident input; 9 taps as 9 matmuls
#     accumulated in a traced value (registers / MXU result storage, no VMEM scratch).
# --------------------------------------------------------------------------
def _k2_kernel(stride, x_ref, s_ref, b_ref, w_ref, out_ref, sums_ref, hp_ref):
    _, H, W, C = x_ref.shape
    cout = out_ref.shape[-1]
    rbo, wo = out_ref.shape[1], out_ref.shape[2]
    rbs = rbo * stride
    rb = pl.program_id(1)
    nrb = pl.num_programs(1)

    s = s_ref[...]                                           # (1, 1, 1, C)
    b = b_ref[...]

    def act(rows):                                           # (k, W, C) f32 -> bf16
        return jnp.maximum(rows * s[0] + b[0], 0.0).astype(hp_ref.dtype)

    r0 = pl.multiple_of(rb * rbs, rbs)

    # core rows of the halo slab
    hp_ref[1:rbs + 1, 1:W + 1, :] = act(
        x_ref[0, pl.ds(r0, rbs), :, :].astype(jnp.float32))
    # 1-wide zero column halo
    zcol = jnp.zeros((rbs + 2, 1, C), hp_ref.dtype)
    hp_ref[:, 0:1, :] = zcol
    hp_ref[:, W + 1:W + 2, :] = zcol

    # top halo row: zeros at the image border, neighbor row otherwise
    @pl.when(rb == 0)
    def _():
        hp_ref[0:1, 1:W + 1, :] = jnp.zeros((1, W, C), hp_ref.dtype)

    @pl.when(rb > 0)
    def _():
        hp_ref[0:1, 1:W + 1, :] = act(
            x_ref[0, pl.ds(r0 - 1, 1), :, :].astype(jnp.float32))

    # bottom halo row
    @pl.when(rb == nrb - 1)
    def _():
        hp_ref[rbs + 1:rbs + 2, 1:W + 1, :] = jnp.zeros((1, W, C), hp_ref.dtype)

    @pl.when(rb < nrb - 1)
    def _():
        hp_ref[rbs + 1:rbs + 2, 1:W + 1, :] = act(
            x_ref[0, pl.ds(r0 + rbs, 1), :, :].astype(jnp.float32))

    # 9 shifted matmuls, register accumulation
    acc = None
    for kh in range(3):
        for kw in range(3):
            if stride == 1:
                win = hp_ref[kh:kh + rbo, kw:kw + wo, :]
            else:
                win = hp_ref[pl.ds(kh, rbo, stride=stride),
                             pl.ds(kw, wo, stride=stride), :]
            tap = jnp.dot(win.reshape(rbo * wo, C), w_ref[kh, kw],
                          preferred_element_type=jnp.float32)
            acc = tap if acc is None else acc + tap

    yb = acc.astype(out_ref.dtype)                           # bf16 round once
    yf = yb.astype(jnp.float32)
    sums_ref[...] = jnp.concatenate(
        [jnp.sum(yf, axis=0, keepdims=True),
         jnp.sum(yf * yf, axis=0, keepdims=True)],
        axis=0).reshape(1, 1, 2, cout)
    out_ref[...] = yb.reshape(1, rbo, wo, cout)


def _k2_call(x, scale, bias, w2, stride):
    n, H, W, c = x.shape
    cout = w2.shape[-1]
    HO, WO = H // stride, W // stride
    row_bytes = 2 * (stride * (W + 2) * c + 2 * WO * cout)
    RBo = _row_block(HO, 1, row_bytes)
    RBs = RBo * stride
    HB = HO // RBo
    return pl.pallas_call(
        functools.partial(_k2_kernel, stride),
        grid=(n, HB),
        in_specs=[
            # full image per batch item stays resident in VMEM (bf16) across row blocks
            pl.BlockSpec((1, H, W, c), lambda i, r: (i, 0, 0, 0)),
            pl.BlockSpec((1, 1, 1, c), lambda i, r: (0, 0, 0, 0)),
            pl.BlockSpec((1, 1, 1, c), lambda i, r: (0, 0, 0, 0)),
            pl.BlockSpec((3, 3, c, cout), lambda i, r: (0, 0, 0, 0)),
        ],
        out_specs=(
            pl.BlockSpec((1, RBo, WO, cout), lambda i, r: (i, r, 0, 0)),
            pl.BlockSpec((1, 1, 2, cout), lambda i, r: (i, r, 0, 0)),
        ),
        out_shape=(
            jax.ShapeDtypeStruct((n, HO, WO, cout), jnp.bfloat16),
            jax.ShapeDtypeStruct((n, HB, 2, cout), jnp.float32),
        ),
        scratch_shapes=[
            pltpu.VMEM((RBs + 2, W + 2, c), jnp.bfloat16),   # per-block bf16 halo slab
        ],
        compiler_params=_cparams(("parallel", "parallel")),
    )(x, scale, bias, w2)


# --------------------------------------------------------------------------
# K3: h = relu(bn3(out2));  out = h @ W3 + downsample
# --------------------------------------------------------------------------
def _k3_kernel(x_ref, s_ref, b_ref, w_ref, ds_ref, out_ref):
    x = x_ref[...].astype(jnp.float32)                       # (1, RB, WO, C)
    _, rb, wd, c = x.shape
    h = jnp.maximum(x * s_ref[...] + b_ref[...], 0.0)
    o = jnp.dot(h.reshape(rb * wd, c).astype(jnp.bfloat16), w_ref[...],
                preferred_element_type=jnp.float32)
    out_ref[...] = (o.reshape(1, rb, wd, -1)
                    + ds_ref[...].astype(jnp.float32)).astype(out_ref.dtype)


def _k3_call(x, scale, bias, w3, ds, out_dtype):
    n, H, W, c = x.shape
    cout = w3.shape[-1]
    row_bytes = 2 * W * (c + cout) + W * cout * jnp.dtype(out_dtype).itemsize
    RB = _row_block(H, 1, row_bytes)
    HB = H // RB
    return pl.pallas_call(
        _k3_kernel,
        grid=(n, HB),
        in_specs=[
            pl.BlockSpec((1, RB, W, c), lambda i, r: (i, r, 0, 0)),
            pl.BlockSpec((1, 1, 1, c), lambda i, r: (0, 0, 0, 0)),
            pl.BlockSpec((1, 1, 1, c), lambda i, r: (0, 0, 0, 0)),
            pl.BlockSpec((c, cout), lambda i, r: (0, 0)),
            pl.BlockSpec((1, RB, W, cout), lambda i, r: (i, r, 0, 0)),
        ],
        out_specs=pl.BlockSpec((1, RB, W, cout), lambda i, r: (i, r, 0, 0)),
        out_shape=jax.ShapeDtypeStruct((n, H, W, cout), out_dtype),
        compiler_params=_cparams(("parallel", "parallel")),
    )(x, scale, bias, w3, ds)


# --------------------------------------------------------------------------
# Full PreActBottleneck forward (NCHW in / NCHW out).
# --------------------------------------------------------------------------
def preact_bottleneck_forward(x_nchw, params, stride=1, out_dtype=jnp.float32):
    n, cin, H, W = x_nchw.shape
    p = params["w1"].shape[0]                 # planes
    c4 = params["w3"].shape[0]                # expansion * planes
    assert stride == 1 or (H % stride == 0 and W % stride == 0)

    CIN = _ceil_to(cin, LANE)
    P = _ceil_to(p, LANE)
    C4 = _ceil_to(c4, LANE)

    identity_ds = "wds" not in params
    if identity_ds:
        assert stride == 1 and cin == c4, (
            "identity downsample requires stride == 1 and in_planes == expansion*planes")

    # bn1 statistics from the raw f32 input (training-mode BN, biased variance).
    xf = x_nchw.astype(jnp.float32)
    m1 = jnp.mean(xf, axis=(0, 2, 3))
    v1 = jnp.var(xf, axis=(0, 2, 3))
    s1 = params["g1"].astype(jnp.float32) / jnp.sqrt(v1 + EPS)
    b1 = params["b1"].astype(jnp.float32) - m1 * s1
    s1 = _pad_axis(s1, 0, CIN).reshape(1, 1, 1, CIN)          # padded chans: scale=bias=0
    b1 = _pad_axis(b1, 0, CIN).reshape(1, 1, 1, CIN)

    # NCHW -> NHWC, bf16, lane-dense channel padding (padded channels stay exact zero).
    x = _pad_axis(jnp.transpose(x_nchw, (0, 2, 3, 1)).astype(jnp.bfloat16), 3, CIN)

    # 1x1 convs as (Cin, Cout) matrices; fuse conv1 and downsample when stride == 1.
    w1 = _pad_axis(_pad_axis(params["w1"][:, :, 0, 0].T.astype(jnp.float32), 0, CIN), 1, P)
    if identity_ds:
        wk1 = w1.astype(jnp.bfloat16)                         # (CIN, P)
        ds_c = C4                                             # == CIN
    else:
        wds = _pad_axis(
            _pad_axis(params["wds"][:, :, 0, 0].T.astype(jnp.float32), 0, CIN), 1, C4)
        wk1 = jnp.concatenate([w1, wds], axis=1).astype(jnp.bfloat16)   # (CIN, P + C4)
        ds_c = C4

    w2 = jnp.transpose(params["w2"], (2, 3, 1, 0)).astype(jnp.float32)  # (3,3,Pin,Pout)
    w2 = _pad_axis(_pad_axis(w2, 2, P), 3, P).astype(jnp.bfloat16)
    w3 = _pad_axis(_pad_axis(params["w3"][:, :, 0, 0].T.astype(jnp.float32), 0, P),
                   1, C4).astype(jnp.bfloat16)

    g2 = _pad_axis(params["g2"].astype(jnp.float32), 0, P)
    b2 = _pad_axis(params["b2"].astype(jnp.float32), 0, P)
    g3 = _pad_axis(params["g3"].astype(jnp.float32), 0, P)
    b3 = _pad_axis(params["b3"].astype(jnp.float32), 0, P)

    # K1: relu(bn1) -> conv1 (+ downsample) + bn2 partial sums.
    out1, ds, sums1 = _k1_call(x, s1, b1, wk1, P, ds_c, stride, identity_ds)
    s2, bb2 = _bn_fold_from_sums(sums1, n * H * W, g2, b2)

    # K2: relu(bn2) -> 3x3 conv (stride, padding=1) + bn3 partial sums.
    out2, sums2 = _k2_call(out1, s2, bb2, w2, stride)
    HO, WO = out2.shape[1], out2.shape[2]
    s3, bb3 = _bn_fold_from_sums(sums2, n * HO * WO, g3, b3)

    # K3: relu(bn3) -> conv3 + residual add.
    out = _k3_call(out2, s3, bb3, w3, ds, out_dtype)

    out = out[..., :c4]
    return jnp.transpose(out, (0, 3, 1, 2))


# --------------------------------------------------------------------------
# Pure-JAX reference (mirrors the PyTorch module, training-mode BN).
# --------------------------------------------------------------------------
def reference_forward(x, params, stride=1):
    def bn_relu(t, gamma, beta):
        mean = jnp.mean(t, axis=(0, 2, 3), keepdims=True)
        var = jnp.var(t, axis=(0, 2, 3), keepdims=True)
        tn = (t - mean) / jnp.sqrt(var + EPS)
        return jax.nn.relu(tn * gamma[None, :, None, None] + beta[None, :, None, None])

    def conv(t, w, s=1, p=0):
        return lax.conv_general_dilated(
            t, w, (s, s), [(p, p), (p, p)],
            dimension_numbers=("NCHW", "OIHW", "NCHW"))

    out = bn_relu(x, params["g1"], params["b1"])
    downsample = conv(out, params["wds"], s=stride)
    out = conv(out, params["w1"])
    out = conv(bn_relu(out, params["g2"], params["b2"]), params["w2"], s=stride, p=1)
    out = conv(bn_relu(out, params["g3"], params["b3"]), params["w3"])
    return out + downsample


if __name__ == "__main__":
    in_planes, planes, expansion = 8, 4, 4
    N, H, W = 2, 16, 16

    key = jax.random.PRNGKey(0)
    ks = jax.random.split(key, 12)
    x = jax.random.normal(ks[0], (N, in_planes, H, W), jnp.float32)

    params = {
        "g1": 1.0 + 0.1 * jax.random.normal(ks[1], (in_planes,), jnp.float32),
        "b1": 0.1 * jax.random.normal(ks[2], (in_planes,), jnp.float32),
        "w1": 0.2 * jax.random.normal(ks[3], (planes, in_planes, 1, 1), jnp.float32),
        "g2": 1.0 + 0.1 * jax.random.normal(ks[4], (planes,), jnp.float32),
        "b2": 0.1 * jax.random.normal(ks[5], (planes,), jnp.float32),
        "w2": 0.1 * jax.random.normal(ks[6], (planes, planes, 3, 3), jnp.float32),
        "g3": 1.0 + 0.1 * jax.random.normal(ks[7], (planes,), jnp.float32),
        "b3": 0.1 * jax.random.normal(ks[8], (planes,), jnp.float32),
        "w3": 0.2 * jax.random.normal(ks[9], (expansion * planes, planes, 1, 1),
                                      jnp.float32),
        "wds": 0.2 * jax.random.normal(ks[10], (expansion * planes, in_planes, 1, 1),
                                       jnp.float32),
    }

    # bf16 input + bf16 HBM intermediates + bf16 MXU operands -> ~3e-2 error budget.
    TOL = 3e-2

    # stride = 1 (fused conv1+downsample matmul path)
    out = jax.block_until_ready(preact_bottleneck_forward(x, params, stride=1))
    ref = reference_forward(x, params, stride=1)
    assert out.shape == ref.shape == (N, expansion * planes, H, W)
    err1 = float(jnp.max(jnp.abs(out - ref)))
    assert jnp.allclose(out, ref, rtol=TOL, atol=TOL), f"stride=1 max abs err {err1}"

    # stride = 2 (split downsample + strided 3x3 path)
    out2 = jax.block_until_ready(preact_bottleneck_forward(x, params, stride=2))
    ref2 = reference_forward(x, params, stride=2)
    assert out2.shape == ref2.shape == (N, expansion * planes, H // 2, W // 2)
    err2 = float(jnp.max(jnp.abs(out2 - ref2)))
    assert jnp.allclose(out2, ref2, rtol=TOL, atol=TOL), f"stride=2 max abs err {err2}"

    print("KERNEL_OK")
</pallas_src>

<mosaic_0001>
module attributes {stable_mosaic.version = 11 : i64} {
  func.func @_k1_kernel(%arg0: i32, %arg1: i32, %arg2: memref<1x16x16x128xbf16, #tpu.memory_space<vmem>>, %arg3: memref<1x1x1x128xf32, #tpu.memory_space<vmem>>, %arg4: memref<1x1x1x128xf32, #tpu.memory_space<vmem>>, %arg5: memref<128x256xbf16, #tpu.memory_space<vmem>>, %arg6: memref<1x16x16x128xbf16, #tpu.memory_space<vmem>>, %arg7: memref<1x16x16x128xbf16, #tpu.memory_space<vmem>>, %arg8: memref<1x1x2x128xf32, #tpu.memory_space<vmem>>) attributes {dimension_semantics = [#tpu.dimension_semantics<parallel>, #tpu.dimension_semantics<parallel>], iteration_bounds = array<i64: 2, 1>, scalar_prefetch = 0 : i64, scratch_operands = 0 : i64, tpu.core_type = #tpu.core_type<tc>, window_params = [{transform_indices = @transform_0, window_bounds = array<i64: 1, 16, 16, 128>}, {pipeline_mode = #tpu.pipeline_mode<synchronous>, transform_indices = @transform_1, window_bounds = array<i64: 1, 1, 1, 128>}, {pipeline_mode = #tpu.pipeline_mode<synchronous>, transform_indices = @transform_2, window_bounds = array<i64: 1, 1, 1, 128>}, {pipeline_mode = #tpu.pipeline_mode<synchronous>, transform_indices = @transform_3, window_bounds = array<i64: 128, 256>}, {transform_indices = @transform_4, window_bounds = array<i64: 1, 16, 16, 128>}, {transform_indices = @transform_5, window_bounds = array<i64: 1, 16, 16, 128>}, {transform_indices = @transform_6, window_bounds = array<i64: 1, 1, 2, 128>}]} {
    %c0 = arith.constant 0 : index
    %c0_0 = arith.constant 0 : index
    %c0_1 = arith.constant 0 : index
    %c0_2 = arith.constant 0 : index
    %0 = vector.load %arg2[%c0, %c0_0, %c0_1, %c0_2] : memref<1x16x16x128xbf16, #tpu.memory_space<vmem>>, vector<1x16x16x128xbf16>
    %1 = arith.extf %0 : vector<1x16x16x128xbf16> to vector<1x16x16x128xf32>
    %c0_3 = arith.constant 0 : index
    %c0_4 = arith.constant 0 : index
    %c0_5 = arith.constant 0 : index
    %c0_6 = arith.constant 0 : index
    %2 = vector.load %arg3[%c0_3, %c0_4, %c0_5, %c0_6] : memref<1x1x1x128xf32, #tpu.memory_space<vmem>>, vector<1x1x1x128xf32>
    %3 = vector.broadcast %2 : vector<1x1x1x128xf32> to vector<1x16x16x128xf32>
    %4 = arith.mulf %1, %3 : vector<1x16x16x128xf32>
    %c0_7 = arith.constant 0 : index
    %c0_8 = arith.constant 0 : index
    %c0_9 = arith.constant 0 : index
    %c0_10 = arith.constant 0 : index
    %5 = vector.load %arg4[%c0_7, %c0_8, %c0_9, %c0_10] : memref<1x1x1x128xf32, #tpu.memory_space<vmem>>, vector<1x1x1x128xf32>
    %6 = vector.broadcast %5 : vector<1x1x1x128xf32> to vector<1x16x16x128xf32>
    %7 = arith.addf %4, %6 : vector<1x16x16x128xf32>
    %cst = arith.constant 0.000000e+00 : f32
    %8 = vector.broadcast %cst : f32 to vector<1x16x16x128xf32>
    %9 = arith.maximumf %7, %8 : vector<1x16x16x128xf32>
    %10 = vector.shape_cast %9 : vector<1x16x16x128xf32> to vector<256x128xf32>
    %11 = arith.truncf %10 : vector<256x128xf32> to vector<256x128xbf16>
    %c0_11 = arith.constant 0 : index
    %c0_12 = arith.constant 0 : index
    %12 = vector.load %arg5[%c0_11, %c0_12] : memref<128x256xbf16, #tpu.memory_space<vmem>>, vector<128x256xbf16>
    %cst_13 = arith.constant dense<0.000000e+00> : vector<256x256xf32>
    %13 = tpu.matmul %11, %12, %cst_13 {dimension_numbers = #tpu.dot_dimension_numbers<[1], [0], [0], [1], [0, 0, 1, 1], [], []>} : vector<256x128xbf16>, vector<128x256xbf16>, vector<256x256xf32> -> vector<256x256xf32>
    %14 = vector.extract_strided_slice %13 {offsets = [0, 0], sizes = [256, 128], strides = [1, 1]} : vector<256x256xf32> to vector<256x128xf32>
    %15 = vector.extract_strided_slice %13 {offsets = [0, 128], sizes = [256, 128], strides = [1, 1]} : vector<256x256xf32> to vector<256x128xf32>
    %16 = vector.shape_cast %15 : vector<256x128xf32> to vector<1x16x16x128xf32>
    %17 = arith.truncf %16 : vector<1x16x16x128xf32> to vector<1x16x16x128xbf16>
    %18 = arith.truncf %14 : vector<256x128xf32> to vector<256x128xbf16>
    %19 = arith.extf %18 : vector<256x128xbf16> to vector<256x128xf32>
    %cst_14 = arith.constant dense<0.000000e+00> : vector<128xf32>
    %20 = vector.multi_reduction <add>, %19, %cst_14 [0] : vector<256x128xf32> to vector<128xf32>
    %21 = vector.shape_cast %20 : vector<128xf32> to vector<1x128xf32>
    %22 = arith.mulf %19, %19 : vector<256x128xf32>
    %cst_15 = arith.constant dense<0.000000e+00> : vector<128xf32>
    %23 = vector.multi_reduction <add>, %22, %cst_15 [0] : vector<256x128xf32> to vector<128xf32>
    %24 = vector.shape_cast %23 : vector<128xf32> to vector<1x128xf32>
    %25 = tpu.concatenate %21, %24 in 0 : vector<1x128xf32>, vector<1x128xf32> -> vector<2x128xf32>
    %26 = vector.shape_cast %25 : vector<2x128xf32> to vector<1x1x2x128xf32>
    %c0_16 = arith.constant 0 : index
    %c0_17 = arith.constant 0 : index
    %c0_18 = arith.constant 0 : index
    %c0_19 = arith.constant 0 : index
    %27 = vector.load %arg8[%c0_16, %c0_17, %c0_18, %c0_19] : memref<1x1x2x128xf32, #tpu.memory_space<vmem>>, vector<1x1x2x128xf32>
    tpu.vector_store %arg8[%c0_16, %c0_17, %c0_18, %c0_19], %26 {strides = array<i32>} : memref<1x1x2x128xf32, #tpu.memory_space<vmem>>, vector<1x1x2x128xf32>,
    %28 = vector.shape_cast %18 : vector<256x128xbf16> to vector<1x16x16x128xbf16>
    %c0_20 = arith.constant 0 : index
    %c0_21 = arith.constant 0 : index
    %c0_22 = arith.constant 0 : index
    %c0_23 = arith.constant 0 : index
    %29 = vector.load %arg6[%c0_20, %c0_21, %c0_22, %c0_23] : memref<1x16x16x128xbf16, #tpu.memory_space<vmem>>, vector<1x16x16x128xbf16>
    tpu.vector_store %arg6[%c0_20, %c0_21, %c0_22, %c0_23], %28 {strides = array<i32>} : memref<1x16x16x128xbf16, #tpu.memory_space<vmem>>, vector<1x16x16x128xbf16>,
    %c0_24 = arith.constant 0 : index
    %c0_25 = arith.constant 0 : index
    %c0_26 = arith.constant 0 : index
    %c0_27 = arith.constant 0 : index
    %30 = vector.load %arg7[%c0_24, %c0_25, %c0_26, %c0_27] : memref<1x16x16x128xbf16, #tpu.memory_space<vmem>>, vector<1x16x16x128xbf16>
    tpu.vector_store %arg7[%c0_24, %c0_25, %c0_26, %c0_27], %17 {strides = array<i32>} : memref<1x16x16x128xbf16, #tpu.memory_space<vmem>>, vector<1x16x16x128xbf16>,
    return
  }
  func.func @transform_0(%arg0: i32, %arg1: i32) -> (i32, i32, i32, i32) {
    %c0_i32 = arith.constant 0 : i32
    %c0_i32_0 = arith.constant 0 : i32
    %c0_i32_1 = arith.constant 0 : i32
    return %arg0, %arg1, %c0_i32, %c0_i32_0 : i32, i32, i32, i32
  }
  func.func @transform_1(%arg0: i32, %arg1: i32) -> (i32, i32, i32, i32) {
    %c0_i32 = arith.constant 0 : i32
    %c0_i32_0 = arith.constant 0 : i32
    %c0_i32_1 = arith.constant 0 : i32
    %c0_i32_2 = arith.constant 0 : i32
    %c0_i32_3 = arith.constant 0 : i32
    return %c0_i32, %c0_i32_0, %c0_i32_1, %c0_i32_2 : i32, i32, i32, i32
  }
  func.func @transform_2(%arg0: i32, %arg1: i32) -> (i32, i32, i32, i32) {
    %c0_i32 = arith.constant 0 : i32
    %c0_i32_0 = arith.constant 0 : i32
    %c0_i32_1 = arith.constant 0 : i32
    %c0_i32_2 = arith.constant 0 : i32
    %c0_i32_3 = arith.constant 0 : i32
    return %c0_i32, %c0_i32_0, %c0_i32_1, %c0_i32_2 : i32, i32, i32, i32
  }
  func.func @transform_3(%arg0: i32, %arg1: i32) -> (i32, i32) {
    %c0_i32 = arith.constant 0 : i32
    %c0_i32_0 = arith.constant 0 : i32
    %c0_i32_1 = arith.constant 0 : i32
    return %c0_i32, %c0_i32_0 : i32, i32
  }
  func.func @transform_4(%arg0: i32, %arg1: i32) -> (i32, i32, i32, i32) {
    %c0_i32 = arith.constant 0 : i32
    %c0_i32_0 = arith.constant 0 : i32
    %c0_i32_1 = arith.constant 0 : i32
    return %arg0, %arg1, %c0_i32, %c0_i32_0 : i32, i32, i32, i32
  }
  func.func @transform_5(%arg0: i32, %arg1: i32) -> (i32, i32, i32, i32) {
    %c0_i32 = arith.constant 0 : i32
    %c0_i32_0 = arith.constant 0 : i32
    %c0_i32_1 = arith.constant 0 : i32
    return %arg0, %arg1, %c0_i32, %c0_i32_0 : i32, i32, i32, i32
  }
  func.func @transform_6(%arg0: i32, %arg1: i32) -> (i32, i32, i32, i32) {
    %c0_i32 = arith.constant 0 : i32
    %c0_i32_0 = arith.constant 0 : i32
    %c0_i32_1 = arith.constant 0 : i32
    return %arg0, %arg1, %c0_i32, %c0_i32_0 : i32, i32, i32, i32
  }
}

</mosaic_0001>

<llo_original>
// kernel: tpu_custom_call.1
$region0: #{tpu_custom_call.1}
  #allocation0 [shape = 'u32[]', space=smem, size = 0x4, offset = 0x4, fixed_abs, tag = 'smem constant byte address 0x4 - core index']
  #allocation1 [shape = 'u32[144,128]{1,0:T(1,128)}', space=vmem, size = 0x12000, scoped, tag = 'internal scratch']
  %s0 = inlined_call_operand.hbm [shape: bf16[2,16,16,128], index: 0, kind: input, shape index: {}]
  %s1 = inlined_call_operand.vmem [shape: f32[1,1,1,128], index: 1, kind: input, shape index: {}]
  %s2 = inlined_call_operand.vmem [shape: f32[1,1,1,128], index: 2, kind: input, shape index: {}]
  %s3 = inlined_call_operand.hbm [shape: bf16[128,256], index: 3, kind: input, shape index: {}]
  %s4 = inlined_call_operand.hbm [shape: bf16[2,16,16,128], index: 4, kind: output, shape index: {0}]
  %s5 = inlined_call_operand.hbm [shape: bf16[2,16,16,128], index: 5, kind: output, shape index: {1}]
  %s6 = inlined_call_operand.hbm [shape: f32[2,1,2,128], index: 6, kind: output, shape index: {2}]
  %7 = xla_tuple %s4, %s5, %s6
  %s8 = sld [smem:[#allocation0]]
  $region73: #{tpu_custom_call.1} parent=0
    _
  %s10 = ssub.s32 1, %s8
  %s11 = scalar_select 0, %s10, %s8
  $region1: #{tpu_custom_call.1} parent=0
    #allocation2 [shape = 'u8[131072]{0}', space=vmem, size = 0x20000, scoped, tag = 'input window, operand 0']
    #allocation3 [shape = 's32[2]{0}', space=sflag, size = 0x8, scoped, tag = 'scoped memory for tpu_custom_call.1']
    #allocation4 [shape = 's32[2]{0}', space=sflag, size = 0x8, scoped, tag = 'scoped memory for tpu_custom_call.1']
    #allocation5 [shape = 'u8[65536]{0}', space=vmem, size = 0x10000, scoped, tag = 'input window, operand 3, single buffered']
    #allocation6 [shape = 's32[1]{0}', space=sflag, size = 0x4, scoped, tag = 'scoped memory for tpu_custom_call.1']
    #allocation7 [shape = 'u8[131072]{0}', space=vmem, size = 0x20000, scoped, tag = 'output window, operand 0']
    #allocation8 [shape = 'u8[131072]{0}', space=vmem, size = 0x20000, scoped, tag = 'output window, operand 1']
    #allocation9 [shape = 's32[2]{0}', space=sflag, size = 0x8, scoped, tag = 'scoped memory for tpu_custom_call.1']
    #allocation10 [shape = 'u8[2048]{0}', space=vmem, size = 0x800, scoped, tag = 'output window, operand 2']
    %12 = vsyncpa [#allocation3], 0
    %s13 = scalar_lea.sflag [#allocation3], 1
    %14 = vsyncpa %s13, 0
    %15 = vsyncpa [#allocation6], 0
    %16 = vsyncpa [#allocation4], 0
    %s17 = scalar_lea.sflag [#allocation4], 1
    %18 = vsyncpa %s17, 0
    %19 = vsyncpa [#allocation9], 0
    %s20 = scalar_lea.sflag [#allocation9], 1
    %21 = vsyncpa %s20, 0
    loop: start=0, step=1, limit=4
    $region2: #{tpu_custom_call.1} parent=1 // loop_pre_header
      _
    $region3: #{tpu_custom_call.1} parent=1 // loop_header
      %s23 = sphi 0, %s27
      %p24 = scmp.ge.s32.totalorder %s23, 4
      %s30 = sphi 0, %s42
      %s31 = sphi 0, %s38
      %s32 = sphi 0, %s30
      %s33 = sphi 0, %s31
      %s34 = sphi 0, %s32
      %s35 = sphi 0, %s33
      %s47 = sphi 0, %s49
      %s50 = sphi 0, %s47
      %s51 = sphi 0, %s50
      %s67 = sphi 0, %s51
      %s71 = sphi 0, %s71
      %s73 = sphi 0, %s71
      %s74 = sphi 0, %s73
      %s88 = sphi 0, %s74
      %s92 = sphi 0, %s92
      %s94 = sphi 0, %s92
      %s95 = sphi 0, %s94
      %s109 = sphi 0, %s95
      %s113 = sphi 0, %s113
      %s115 = sphi 0, %s113
      %s116 = sphi 0, %s115
      %s130 = sphi 0, %s116
      %s138 = sphi 0, %s140
      %s141 = sphi 0, %s138
      %s142 = sphi 0, %s141
      %s158 = sphi 0, %s142
      %s166 = sphi 0, %s168
      %s169 = sphi 0, %s166
      %s170 = sphi 0, %s169
      %s186 = sphi 0, %s170
      %s194 = sphi 0, %s196
      %s197 = sphi 0, %s194
      %s198 = sphi 0, %s197
      %s214 = sphi 0, %s198
    $region4: #{tpu_custom_call.1} parent=1 // loop_header_branch
      %26 = sbr.rel (%p24) target = $region8
    $region5: #{tpu_custom_call.1} parent=1 // loop_body
      %s28 = ssub.s32 %s23, 1
      %s29 = ssub.s32 %s23, 2
      %s36 = sadd.s32 1, %s31
      %p37 = scmp.ge.s32.totalorder %s36, 1
      %s38 = scalar_select %p37, 0, %s36
      %s39 = sadd.s32 1, %s30
      %s40 = scalar_select %p37, %s39, %s30
      %p41 = scmp.ge.s32.totalorder %s40, 2
      %s42 = scalar_select %p41, 0, %s40
      %s43 = ssub.s32 %s30, %s42
      %s44 = ssub.s32 %s31, %s38
      %s45 = sor.u32 %s43, %s44
      %p46 = scmp.eq.s32.totalorder %s45, 0
      %s48 = sadd.s32 %s47, 1
      %s49 = scalar_select %p46, %s47, %s48
      %p52 = pneg %p46
      %p53 = scmp.eq.s32.totalorder %s23, 1
      %p54 = por %p52, %p53
      %p55 = scmp.ne.s32.totalorder %s47, %s50
      %p56 = scmp.eq.s32.totalorder %s23, 0
      %p57 = por %p55, %p56
      %p58 = scmp.ne.s32.totalorder %s47, %s50
      %p59 = scmp.eq.s32.totalorder %s28, 1
      %p60 = por %p58, %p59
      %p61 = scmp.ne.s32.totalorder %s50, %s51
      %p62 = scmp.eq.s32.totalorder %s28, 0
      %p63 = por %p61, %p62
      %p64 = scmp.ne.s32.totalorder %s50, %s51
      %p65 = scmp.eq.s32.totalorder %s29, 1
      %p66 = por %p64, %p65
      %p68 = scmp.ne.s32.totalorder %s51, %s67
      %p69 = scmp.eq.s32.totalorder %s29, 0
      %p70 = por %p68, %p69
      %s72 = sadd.s32 %s71, 1
      %p75 = scmp.eq.s32.totalorder %s23, 1
      %p76 = scmp.ne.s32.totalorder %s71, %s73
      %p77 = scmp.eq.s32.totalorder %s23, 0
      %p78 = por %p76, %p77
      %p79 = scmp.ne.s32.totalorder %s71, %s73
      %p80 = scmp.eq.s32.totalorder %s28, 1
      %p81 = por %p79, %p80
      %p82 = scmp.ne.s32.totalorder %s73, %s74
      %p83 = scmp.eq.s32.totalorder %s28, 0
      %p84 = por %p82, %p83
      %p85 = scmp.ne.s32.totalorder %s73, %s74
      %p86 = scmp.eq.s32.totalorder %s29, 1
      %p87 = por %p85, %p86
      %p89 = scmp.ne.s32.totalorder %s74, %s88
      %p90 = scmp.eq.s32.totalorder %s29, 0
      %p91 = por %p89, %p90
      %s93 = sadd.s32 %s92, 1
      %p96 = scmp.eq.s32.totalorder %s23, 1
      %p97 = scmp.ne.s32.totalorder %s92, %s94
      %p98 = scmp.eq.s32.totalorder %s23, 0
      %p99 = por %p97, %p98
      %p100 = scmp.ne.s32.totalorder %s92, %s94
      %p101 = scmp.eq.s32.totalorder %s28, 1
      %p102 = por %p100, %p101
      %p103 = scmp.ne.s32.totalorder %s94, %s95
      %p104 = scmp.eq.s32.totalorder %s28, 0
      %p105 = por %p103, %p104
      %p106 = scmp.ne.s32.totalorder %s94, %s95
      %p107 = scmp.eq.s32.totalorder %s29, 1
      %p108 = por %p106, %p107
      %p110 = scmp.ne.s32.totalorder %s95, %s109
      %p111 = scmp.eq.s32.totalorder %s29, 0
      %p112 = por %p110, %p111
      %s114 = sadd.s32 %s113, 1
      %p117 = scmp.eq.s32.totalorder %s23, 1
      %p118 = scmp.ne.s32.totalorder %s113, %s115
      %p119 = scmp.eq.s32.totalorder %s23, 0
      %p120 = por %p118, %p119
      %p121 = scmp.ne.s32.totalorder %s113, %s115
      %p122 = scmp.eq.s32.totalorder %s28, 1
      %p123 = por %p121, %p122
      %p124 = scmp.ne.s32.totalorder %s115, %s116
      %p125 = scmp.eq.s32.totalorder %s28, 0
      %p126 = por %p124, %p125
      %p127 = scmp.ne.s32.totalorder %s115, %s116
      %p128 = scmp.eq.s32.totalorder %s29, 1
      %p129 = por %p127, %p128
      %p131 = scmp.ne.s32.totalorder %s116, %s130
      %p132 = scmp.eq.s32.totalorder %s29, 0
      %p133 = por %p131, %p132
      %s134 = ssub.s32 %s30, %s42
      %s135 = ssub.s32 %s31, %s38
      %s136 = sor.u32 %s134, %s135
      %p137 = scmp.eq.s32.totalorder %s136, 0
      %s139 = sadd.s32 %s138, 1
      %s140 = scalar_select %p137, %s138, %s139
      %p143 = pneg %p137
      %p144 = scmp.eq.s32.totalorder %s23, 1
      %p145 = por %p143, %p144
      %p146 = scmp.ne.s32.totalorder %s138, %s141
      %p147 = scmp.eq.s32.totalorder %s23, 0
      %p148 = por %p146, %p147
      %p149 = scmp.ne.s32.totalorder %s138, %s141
      %p150 = scmp.eq.s32.totalorder %s28, 1
      %p151 = por %p149, %p150
      %p152 = scmp.ne.s32.totalorder %s141, %s142
      %p153 = scmp.eq.s32.totalorder %s28, 0
      %p154 = por %p152, %p153
      %p155 = scmp.ne.s32.totalorder %s141, %s142
      %p156 = scmp.eq.s32.totalorder %s29, 1
      %p157 = por %p155, %p156
      %p159 = scmp.ne.s32.totalorder %s142, %s158
      %p160 = scmp.eq.s32.totalorder %s29, 0
      %p161 = por %p159, %p160
      %s162 = ssub.s32 %s30, %s42
      %s163 = ssub.s32 %s31, %s38
      %s164 = sor.u32 %s162, %s163
      %p165 = scmp.eq.s32.totalorder %s164, 0
      %s167 = sadd.s32 %s166, 1
      %s168 = scalar_select %p165, %s166, %s167
      %p171 = pneg %p165
      %p172 = scmp.eq.s32.totalorder %s23, 1
      %p173 = por %p171, %p172
      %p174 = scmp.ne.s32.totalorder %s166, %s169
      %p175 = scmp.eq.s32.totalorder %s23, 0
      %p176 = por %p174, %p175
      %p177 = scmp.ne.s32.totalorder %s166, %s169
      %p178 = scmp.eq.s32.totalorder %s28, 1
      %p179 = por %p177, %p178
      %p180 = scmp.ne.s32.totalorder %s169, %s170
      %p181 = scmp.eq.s32.totalorder %s28, 0
      %p182 = por %p180, %p181
      %p183 = scmp.ne.s32.totalorder %s169, %s170
      %p184 = scmp.eq.s32.totalorder %s29, 1
      %p185 = por %p183, %p184
      %p187 = scmp.ne.s32.totalorder %s170, %s186
      %p188 = scmp.eq.s32.totalorder %s29, 0
      %p189 = por %p187, %p188
      %s190 = ssub.s32 %s30, %s42
      %s191 = ssub.s32 %s31, %s38
      %s192 = sor.u32 %s190, %s191
      %p193 = scmp.eq.s32.totalorder %s192, 0
      %s195 = sadd.s32 %s194, 1
      %s196 = scalar_select %p193, %s194, %s195
      %p199 = pneg %p193
      %p200 = scmp.eq.s32.totalorder %s23, 1
      %p201 = por %p199, %p200
      %p202 = scmp.ne.s32.totalorder %s194, %s197
      %p203 = scmp.eq.s32.totalorder %s23, 0
      %p204 = por %p202, %p203
      %p205 = scmp.ne.s32.totalorder %s194, %s197
      %p206 = scmp.eq.s32.totalorder %s28, 1
      %p207 = por %p205, %p206
      %p208 = scmp.ne.s32.totalorder %s197, %s198
      %p209 = scmp.eq.s32.totalorder %s28, 0
      %p210 = por %p208, %p209
      %p211 = scmp.ne.s32.totalorder %s197, %s198
      %p212 = scmp.eq.s32.totalorder %s29, 1
      %p213 = por %p211, %p212
      %p215 = scmp.ne.s32.totalorder %s198, %s214
      %p216 = scmp.eq.s32.totalorder %s29, 0
      %p217 = por %p215, %p216
      %p218 = scmp.le.s32.totalorder 1, %s23
      %p219 = scmp.lt.s32.totalorder %s23, 3
      %p220 = pnand %p218, %p219
      %p221 = pneg %p220
      // Predicated region
      $region9: #{tpu_custom_call.1} parent=5 // pred_check
        _
      $region10: #{tpu_custom_call.1} parent=5 // pred_check_branch
        %223 = sbr.rel (%p220) target = $region12
      $region11: #{tpu_custom_call.1} parent=5 // pred_region
        %s224 = ssub.s32 %s23, 1
        // Predicated region
        $region13: #{tpu_custom_call.1} parent=11 // pred_check
          %p225 = pneg %p84
        $region14: #{tpu_custom_call.1} parent=11 // pred_check_branch
          %227 = sbr.rel (%p225) target = $region16
        $region15: #{tpu_custom_call.1} parent=11 // pred_region
          _
        $region16: #{tpu_custom_call.1} parent=11 // pred_fallthru
          _
        // Predicated region
        $region17: #{tpu_custom_call.1} parent=11 // pred_check
          %p228 = pneg %p105
        $region18: #{tpu_custom_call.1} parent=11 // pred_check_branch
          %230 = sbr.rel (%p228) target = $region20
        $region19: #{tpu_custom_call.1} parent=11 // pred_region
          _
        $region20: #{tpu_custom_call.1} parent=11 // pred_fallthru
          _
        // Predicated region
        $region21: #{tpu_custom_call.1} parent=11 // pred_check
          %p231 = pneg %p126
        $region22: #{tpu_custom_call.1} parent=11 // pred_check_branch
          %233 = sbr.rel (%p231) target = $region24
        $region23: #{tpu_custom_call.1} parent=11 // pred_region
          %s235 = ssub.s32 2048, 2048
          %236 = vsyncadd [#allocation6], %s235
          %s237 = sshll.u32 [#allocation5], 4
          %s238 = int_to_ptr.vmem [resolvable:$true] %s237
          %243 = dma.hbm_to_vmem [thread:$0]  %s3, 2048, %s238, [#allocation6], 128, 128, 8
        $region24: #{tpu_custom_call.1} parent=11 // pred_fallthru
          _
      $region12: #{tpu_custom_call.1} parent=5 // pred_fallthru
        _
      %p244 = scmp.lt.s32.totalorder %s23, 2
      // Predicated region
      $region25: #{tpu_custom_call.1} parent=5 // pred_check
        %p245 = pneg %p244
      $region26: #{tpu_custom_call.1} parent=5 // pred_check_branch
        %247 = sbr.rel (%p245) target = $region28
      $region27: #{tpu_custom_call.1} parent=5 // pred_region
        // Predicated region
        $region29: #{tpu_custom_call.1} parent=27 // pred_check
          %p248 = pneg %p57
        $region30: #{tpu_custom_call.1} parent=27 // pred_check_branch
          %250 = sbr.rel (%p248) target = $region32
        $region31: #{tpu_custom_call.1} parent=27 // pred_region
          %s251 = sand.u32 %s47, 1
          %s252 = scalar_lea.sflag [#allocation3], %s251
          %s253 = sand.u32 %s47, 1
          %s254 = smul.addr %s253, 128
          %s255 = scalar_lea.vmem [#allocation2], %s254
          %s256 = smul.u32 16, %s31
          %s258 = ssub.s32 2048, 2048
          %259 = vsyncadd %s252, %s258
          %s260 = smul.addr %s256, 2
          %s261 = smul.addr %s30, 32
          %s262 = sadd.s32 %s260, %s261
          %s263 = smul.addr %s262, 64
          %s264 = scalar_lea.hbm %s0, %s263
          %s265 = sshll.u32 %s255, 4
          %s266 = int_to_ptr.vmem [resolvable:$true] %s265
          %271 = dma.hbm_to_vmem [thread:$0]  %s264, 2048, %s266, %s252, 64, 64, 4
        $region32: #{tpu_custom_call.1} parent=27 // pred_fallthru
          _
      $region28: #{tpu_custom_call.1} parent=5 // pred_fallthru
        _
      %p272 = scmp.le.s32.totalorder 1, %s23
      %p273 = scmp.lt.s32.totalorder %s23, 3
      %p274 = pnand %p272, %p273
      %p275 = pneg %p274
      // Predicated region
      $region33: #{tpu_custom_call.1} parent=5 // pred_check
        _
      $region34: #{tpu_custom_call.1} parent=5 // pred_check_branch
        %277 = sbr.rel (%p274) target = $region36
      $region35: #{tpu_custom_call.1} parent=5 // pred_region
        %s278 = ssub.s32 %s23, 1
        %s279 = sand.u32 %s50, 1
        %s280 = scalar_lea.sflag [#allocation3], %s279
        %s281 = sand.u32 %s50, 1
        %s282 = smul.addr %s281, 128
        %s283 = scalar_lea.vmem [#allocation2], %s282
        // Predicated region
        $region37: #{tpu_custom_call.1} parent=35 // pred_check
          %p284 = pneg %p63
        $region38: #{tpu_custom_call.1} parent=35 // pred_check_branch
          %286 = sbr.rel (%p284) target = $region40
        $region39: #{tpu_custom_call.1} parent=35 // pred_region
          %287 = dma.done %s280, 2048
        $region40: #{tpu_custom_call.1} parent=35 // pred_fallthru
          _
        // Predicated region
        $region41: #{tpu_custom_call.1} parent=35 // pred_check
          %p288 = pneg %p126
        $region42: #{tpu_custom_call.1} parent=35 // pred_check_branch
          %290 = sbr.rel (%p288) target = $region44
        $region43: #{tpu_custom_call.1} parent=35 // pred_region
          %291 = dma.done [#allocation6], 2048
        $region44: #{tpu_custom_call.1} parent=35 // pred_fallthru
          _
        %s292 = sand.u32 %s50, 1
        %s293 = scalar_lea.sflag [#allocation3], %s292
        %s294 = sand.u32 %s50, 1
        %s295 = smul.addr %s294, 128
        %s296 = scalar_lea.vmem [#allocation2], %s295
        %p297 = pneg %p63
        %p298 = pneg %p60
        %p299 = pneg %p84
        %p300 = pneg %p81
        %p301 = pneg %p105
        %p302 = pneg %p102
        %p303 = pneg %p126
        %p304 = pneg %p123
        %p305 = pneg %p154
        %p306 = pneg %p151
        %s307 = sand.u32 %s141, 1
        %s308 = scalar_lea.sflag [#allocation4], %s307
        %s309 = sand.u32 %s141, 1
        %s310 = smul.addr %s309, 128
        %s311 = scalar_lea.vmem [#allocation7], %s310
        %p312 = pneg %p182
        %p313 = pneg %p179
        %s314 = sand.u32 %s28, 1
        %s315 = scalar_lea.sflag [#allocation9], %s314
        %s316 = sand.u32 %s169, 1
        %s317 = smul.addr %s316, 128
        %s318 = scalar_lea.vmem [#allocation8], %s317
        %p319 = pneg %p210
        %p320 = pneg %p207
        %s321 = sand.u32 %s28, 1
        %s322 = scalar_lea.sflag [#allocation9], %s321
        %s323 = sand.u32 %s197, 1
        %s324 = smul.addr %s323, 2
        %s325 = scalar_lea.vmem [#allocation10], %s324
        %s326 = smul.u32 16, %s33
        %s327 = smul.u32 16, %s33
        %s328 = smul.u32 16, %s33
        %v330 = vld [vmem:[%s283] sm:$0xf]
        %v331 = vld [vmem:[%s283 + $0x4] sm:$0xf]
        %v332 = vld [vmem:[%s283 + $0x8] sm:$0xf]
        %v333 = vld [vmem:[%s283 + $0xc] sm:$0xf]
        %v334 = vld [vmem:[%s283 + $0x10] sm:$0xf]
        %v335 = vld [vmem:[%s283 + $0x14] sm:$0xf]
        %v336 = vld [vmem:[%s283 + $0x18] sm:$0xf]
        %v337 = vld [vmem:[%s283 + $0x1c] sm:$0xf]
        %v338 = vld [vmem:[%s283 + $0x20] sm:$0xf]
        %v339 = vld [vmem:[%s283 + $0x24] sm:$0xf]
        %v340 = vld [vmem:[%s283 + $0x28] sm:$0xf]
        %v341 = vld [vmem:[%s283 + $0x2c] sm:$0xf]
        %v342 = vld [vmem:[%s283 + $0x30] sm:$0xf]
        %v343 = vld [vmem:[%s283 + $0x34] sm:$0xf]
        %v344 = vld [vmem:[%s283 + $0x38] sm:$0xf]
        %v345 = vld [vmem:[%s283 + $0x3c] sm:$0xf]
        %v346 = vld [vmem:[%s283 + $0x40] sm:$0xf]
        %v347 = vld [vmem:[%s283 + $0x44] sm:$0xf]
        %v348 = vld [vmem:[%s283 + $0x48] sm:$0xf]
        %v349 = vld [vmem:[%s283 + $0x4c] sm:$0xf]
        %v350 = vld [vmem:[%s283 + $0x50] sm:$0xf]
        %v351 = vld [vmem:[%s283 + $0x54] sm:$0xf]
        %v352 = vld [vmem:[%s283 + $0x58] sm:$0xf]
        %v353 = vld [vmem:[%s283 + $0x5c] sm:$0xf]
        %v354 = vld [vmem:[%s283 + $0x60] sm:$0xf]
        %v355 = vld [vmem:[%s283 + $0x64] sm:$0xf]
        %v356 = vld [vmem:[%s283 + $0x68] sm:$0xf]
        %v357 = vld [vmem:[%s283 + $0x6c] sm:$0xf]
        %v358 = vld [vmem:[%s283 + $0x70] sm:$0xf]
        %v359 = vld [vmem:[%s283 + $0x74] sm:$0xf]
        %v360 = vld [vmem:[%s283 + $0x78] sm:$0xf]
        %v361 = vld [vmem:[%s283 + $0x7c] sm:$0xf]
        %v362 = vunpack.c.l.bf16 %v330
        %v363 = vunpack.c.l.bf16 %v331
        %v364 = vunpack.c.l.bf16 %v332
        %v365 = vunpack.c.l.bf16 %v333
        %v366 = vunpack.c.l.bf16 %v334
        %v367 = vunpack.c.l.bf16 %v335
        %v368 = vunpack.c.l.bf16 %v336
        %v369 = vunpack.c.l.bf16 %v337
        %v370 = vunpack.c.l.bf16 %v338
        %v371 = vunpack.c.l.bf16 %v339
        %v372 = vunpack.c.l.bf16 %v340
        %v373 = vunpack.c.l.bf16 %v341
        %v374 = vunpack.c.l.bf16 %v342
        %v375 = vunpack.c.l.bf16 %v343
        %v376 = vunpack.c.l.bf16 %v344
        %v377 = vunpack.c.l.bf16 %v345
        %v378 = vunpack.c.l.bf16 %v346
        %v379 = vunpack.c.l.bf16 %v347
        %v380 = vunpack.c.l.bf16 %v348
        %v381 = vunpack.c.l.bf16 %v349
        %v382 = vunpack.c.l.bf16 %v350
        %v383 = vunpack.c.l.bf16 %v351
        %v384 = vunpack.c.l.bf16 %v352
        %v385 = vunpack.c.l.bf16 %v353
        %v386 = vunpack.c.l.bf16 %v354
        %v387 = vunpack.c.l.bf16 %v355
        %v388 = vunpack.c.l.bf16 %v356
        %v389 = vunpack.c.l.bf16 %v357
        %v390 = vunpack.c.l.bf16 %v358
        %v391 = vunpack.c.l.bf16 %v359
        %v392 = vunpack.c.l.bf16 %v360
        %v393 = vunpack.c.l.bf16 %v361
        %v394 = vld [vmem:[%s1] sm:$0x1]
        %v396 = vlaneseq
        %v397 = vshrl.u32 %v396, 7
        %v398 = vsub.s32 0, %v397
        %v399 = vrot.slane %v394, %v398
        %v401 = vmul.f32 %v362, %v399
        %v402 = vmul.f32 %v363, %v399
        %v403 = vmul.f32 %v364, %v399
        %v404 = vmul.f32 %v365, %v399
        %v405 = vmul.f32 %v366, %v399
        %v406 = vmul.f32 %v367, %v399
        %v407 = vmul.f32 %v368, %v399
        %v408 = vmul.f32 %v369, %v399
        %v409 = vmul.f32 %v370, %v399
        %v410 = vmul.f32 %v371, %v399
        %v411 = vmul.f32 %v372, %v399
        %v412 = vmul.f32 %v373, %v399
        %v413 = vmul.f32 %v374, %v399
        %v414 = vmul.f32 %v375, %v399
        %v415 = vmul.f32 %v376, %v399
        %v416 = vmul.f32 %v377, %v399
        %v417 = vmul.f32 %v378, %v399
        %v418 = vmul.f32 %v379, %v399
        %v419 = vmul.f32 %v380, %v399
        %v420 = vmul.f32 %v381, %v399
        %v421 = vmul.f32 %v382, %v399
        %v422 = vmul.f32 %v383, %v399
        %v423 = vmul.f32 %v384, %v399
        %v424 = vmul.f32 %v385, %v399
        %v425 = vmul.f32 %v386, %v399
        %v426 = vmul.f32 %v387, %v399
        %v427 = vmul.f32 %v388, %v399
        %v428 = vmul.f32 %v389, %v399
        %v429 = vmul.f32 %v390, %v399
        %v430 = vmul.f32 %v391, %v399
        %v431 = vmul.f32 %v392, %v399
        %v432 = vmul.f32 %v393, %v399
        %v433 = vld [vmem:[%s2] sm:$0x1]
        %v435 = vlaneseq
        %v436 = vshrl.u32 %v435, 7
        %v437 = vsub.s32 0, %v436
        %v438 = vrot.slane %v433, %v437
        %v440 = vadd.f32 %v401, %v438
        %v441 = vadd.f32 %v402, %v438
        %v442 = vadd.f32 %v403, %v438
        %v443 = vadd.f32 %v404, %v438
        %v444 = vadd.f32 %v405, %v438
        %v445 = vadd.f32 %v406, %v438
        %v446 = vadd.f32 %v407, %v438
        %v447 = vadd.f32 %v408, %v438
        %v448 = vadd.f32 %v409, %v438
        %v449 = vadd.f32 %v410, %v438
        %v450 = vadd.f32 %v411, %v438
        %v451 = vadd.f32 %v412, %v438
        %v452 = vadd.f32 %v413, %v438
        %v453 = vadd.f32 %v414, %v438
        %v454 = vadd.f32 %v415, %v438
        %v455 = vadd.f32 %v416, %v438
        %v456 = vadd.f32 %v417, %v438
        %v457 = vadd.f32 %v418, %v438
        %v458 = vadd.f32 %v419, %v438
        %v459 = vadd.f32 %v420, %v438
        %v460 = vadd.f32 %v421, %v438
        %v461 = vadd.f32 %v422, %v438
        %v462 = vadd.f32 %v423, %v438
        %v463 = vadd.f32 %v424, %v438
        %v464 = vadd.f32 %v425, %v438
        %v465 = vadd.f32 %v426, %v438
        %v466 = vadd.f32 %v427, %v438
        %v467 = vadd.f32 %v428, %v438
        %v468 = vadd.f32 %v429, %v438
        %v469 = vadd.f32 %v430, %v438
        %v470 = vadd.f32 %v431, %v438
        %v471 = vadd.f32 %v432, %v438
        %v472 = vmax.f32 %v440, 0.0
        %v473 = vmax.f32 %v441, 0.0
        %v474 = vmax.f32 %v442, 0.0
        %v475 = vmax.f32 %v443, 0.0
        %v476 = vmax.f32 %v444, 0.0
        %v477 = vmax.f32 %v445, 0.0
        %v478 = vmax.f32 %v446, 0.0
        %v479 = vmax.f32 %v447, 0.0
        %v480 = vmax.f32 %v448, 0.0
        %v481 = vmax.f32 %v449, 0.0
        %v482 = vmax.f32 %v450, 0.0
        %v483 = vmax.f32 %v451, 0.0
        %v484 = vmax.f32 %v452, 0.0
        %v485 = vmax.f32 %v453, 0.0
        %v486 = vmax.f32 %v454, 0.0
        %v487 = vmax.f32 %v455, 0.0
        %v488 = vmax.f32 %v456, 0.0
        %v489 = vmax.f32 %v457, 0.0
        %v490 = vmax.f32 %v458, 0.0
        %v491 = vmax.f32 %v459, 0.0
        %v492 = vmax.f32 %v460, 0.0
        %v493 = vmax.f32 %v461, 0.0
        %v494 = vmax.f32 %v462, 0.0
        %v495 = vmax.f32 %v463, 0.0
        %v496 = vmax.f32 %v464, 0.0
        %v497 = vmax.f32 %v465, 0.0
        %v498 = vmax.f32 %v466, 0.0
        %v499 = vmax.f32 %v467, 0.0
        %v500 = vmax.f32 %v468, 0.0
        %v501 = vmax.f32 %v469, 0.0
        %v502 = vmax.f32 %v470, 0.0
        %v503 = vmax.f32 %v471, 0.0
        %v504 = vpack.c.bf16 %v473, %v472
        %v505 = vpack.c.bf16 %v475, %v474
        %v506 = vpack.c.bf16 %v477, %v476
        %v507 = vpack.c.bf16 %v479, %v478
        %v508 = vpack.c.bf16 %v481, %v480
        %v509 = vpack.c.bf16 %v483, %v482
        %v510 = vpack.c.bf16 %v485, %v484
        %v511 = vpack.c.bf16 %v487, %v486
        %v512 = vpack.c.bf16 %v489, %v488
        %v513 = vpack.c.bf16 %v491, %v490
        %v514 = vpack.c.bf16 %v493, %v492
        %v515 = vpack.c.bf16 %v495, %v494
        %v516 = vpack.c.bf16 %v497, %v496
        %v517 = vpack.c.bf16 %v499, %v498
        %v518 = vpack.c.bf16 %v501, %v500
        %v519 = vpack.c.bf16 %v503, %v502
        %v520 = vld [vmem:[#allocation5] sm:$0xff]
        %v521 = vld [vmem:[#allocation5 + $0x8] sm:$0xff]
        %v522 = vld [vmem:[#allocation5 + $0x10] sm:$0xff]
        %v523 = vld [vmem:[#allocation5 + $0x18] sm:$0xff]
        %v524 = vld [vmem:[#allocation5 + $0x20] sm:$0xff]
        %v525 = vld [vmem:[#allocation5 + $0x28] sm:$0xff]
        %v526 = vld [vmem:[#allocation5 + $0x30] sm:$0xff]
        %v527 = vld [vmem:[#allocation5 + $0x38] sm:$0xff]
        %v528 = vld [vmem:[#allocation5 + $0x40] sm:$0xff]
        %v529 = vld [vmem:[#allocation5 + $0x48] sm:$0xff]
        %v530 = vld [vmem:[#allocation5 + $0x50] sm:$0xff]
        %v531 = vld [vmem:[#allocation5 + $0x58] sm:$0xff]
        %v532 = vld [vmem:[#allocation5 + $0x60] sm:$0xff]
        %v533 = vld [vmem:[#allocation5 + $0x68] sm:$0xff]
        %v534 = vld [vmem:[#allocation5 + $0x70] sm:$0xff]
        %v535 = vld [vmem:[#allocation5 + $0x78] sm:$0xff]
        %v552 = vunpack.c.l.b16 %v520
        %v553 = vunpack.c.h.b16 %v520
        %v554 = vunpack.c.l.b16 %v521
        %v555 = vunpack.c.h.b16 %v521
        %v556 = vunpack.c.l.b16 %v522
        %v557 = vunpack.c.h.b16 %v522
        %v558 = vunpack.c.l.b16 %v523
        %v559 = vunpack.c.h.b16 %v523
        %v560 = vunpack.c.l.b16 %v524
        %v561 = vunpack.c.h.b16 %v524
        %v562 = vunpack.c.l.b16 %v525
        %v563 = vunpack.c.h.b16 %v525
        %v564 = vunpack.c.l.b16 %v526
        %v565 = vunpack.c.h.b16 %v526
        %v566 = vunpack.c.l.b16 %v527
        %v567 = vunpack.c.h.b16 %v527
        %v568 = vunpack.c.l.b16 %v528
        %v569 = vunpack.c.h.b16 %v528
        %v570 = vunpack.c.l.b16 %v529
        %v571 = vunpack.c.h.b16 %v529
        %v572 = vunpack.c.l.b16 %v530
        %v573 = vunpack.c.h.b16 %v530
        %v574 = vunpack.c.l.b16 %v531
        %v575 = vunpack.c.h.b16 %v531
        %v576 = vunpack.c.l.b16 %v532
        %v577 = vunpack.c.h.b16 %v532
        %v578 = vunpack.c.l.b16 %v533
        %v579 = vunpack.c.h.b16 %v533
        %v580 = vunpack.c.l.b16 %v534
        %v581 = vunpack.c.h.b16 %v534
        %v582 = vunpack.c.l.b16 %v535
        %v583 = vunpack.c.h.b16 %v535
        %v584 = vpack.c.b16 %v554, %v552
        %v585 = vpack.c.b16 %v555, %v553
        %v586 = vpack.c.b16 %v558, %v556
        %v587 = vpack.c.b16 %v559, %v557
        %v588 = vpack.c.b16 %v562, %v560
        %v589 = vpack.c.b16 %v563, %v561
        %v590 = vpack.c.b16 %v566, %v564
        %v591 = vpack.c.b16 %v567, %v565
        %v592 = vpack.c.b16 %v570, %v568
        %v593 = vpack.c.b16 %v571, %v569
        %v594 = vpack.c.b16 %v574, %v572
        %v595 = vpack.c.b16 %v575, %v573
        %v596 = vpack.c.b16 %v578, %v576
        %v597 = vpack.c.b16 %v579, %v577
        %v598 = vpack.c.b16 %v582, %v580
        %v599 = vpack.c.b16 %v583, %v581
        %616 = vmatprep.subr.bf16.mxu0 %v585
        %617 = vmatpush1.bf16.msra.mxu0 %v584
        %618 = vmatprep.subr.bf16.mxu0 %v587
        %619 = vmatpush1.bf16.msra.mxu0 %v586
        %620 = vmatprep.subr.bf16.mxu0 %v589
        %621 = vmatpush1.bf16.msra.mxu0 %v588
        %622 = vmatprep.subr.bf16.mxu0 %v591
        %623 = vmatpush1.bf16.msra.mxu0 %v590
        %624 = vmatprep.subr.bf16.mxu0 %v593
        %625 = vmatpush1.bf16.msra.mxu0 %v592
        %626 = vmatprep.subr.bf16.mxu0 %v595
        %627 = vmatpush1.bf16.msra.mxu0 %v594
        %628 = vmatprep.subr.bf16.mxu0 %v597
        %629 = vmatpush1.bf16.msra.mxu0 %v596
        %630 = vmatprep.subr.bf16.mxu0 %v599
        %631 = vmatpush1.bf16.msra.mxu0 %v598
        %632 = vmatprep.subr.bf16.mxu0 0
        %633 = vmatpush1.bf16.msra.mxu0 0
        %634 = vmatprep.subr.bf16.mxu0 0
        %635 = vmatpush1.bf16.msra.mxu0 0
        %636 = vmatprep.subr.bf16.mxu0 0
        %637 = vmatpush1.bf16.msra.mxu0 0
        %638 = vmatprep.subr.bf16.mxu0 0
        %639 = vmatpush1.bf16.msra.mxu0 0
        %640 = vmatprep.subr.bf16.mxu0 0
        %641 = vmatpush1.bf16.msra.mxu0 0
        %642 = vmatprep.subr.bf16.mxu0 0
        %643 = vmatpush1.bf16.msra.mxu0 0
        %644 = vmatprep.subr.bf16.mxu0 0
        %645 = vmatpush1.bf16.msra.mxu0 0
        %646 = vmatprep.subr.bf16.mxu0 0
        %647 = vmatpush1.bf16.msra.mxu0 0
        %648 = vmatprep.mubr.bf16.mxu0 0
        %649 = vmatmul.mubr.bf16.gmra.mrb[0].mxu0 %v504
        %v650 = vpop.f32.mrb[0].mxu0
        %v651 = vadd.f32 0.0, %v650
        %v652 = vpop.f32.mrb[0].mxu0
        %v653 = vadd.f32 0.0, %v652
        %v654 = vpop.f32.mrb[0].mxu0
        %v655 = vadd.f32 0.0, %v654
        %v656 = vpop.f32.mrb[0].mxu0
        %v657 = vadd.f32 0.0, %v656
        %658 = vmatprep.mubr.bf16.mxu0 0
        %659 = vmatmul.mubr.bf16.gmra.mrb[0].mxu0 %v505
        %v660 = vpop.f32.mrb[0].mxu0
        %v661 = vadd.f32 0.0, %v660
        %v662 = vpop.f32.mrb[0].mxu0
        %v663 = vadd.f32 0.0, %v662
        %v664 = vpop.f32.mrb[0].mxu0
        %v665 = vadd.f32 0.0, %v664
        %v666 = vpop.f32.mrb[0].mxu0
        %v667 = vadd.f32 0.0, %v666
        %668 = vmatprep.mubr.bf16.mxu0 0
        %669 = vmatmul.mubr.bf16.gmra.mrb[0].mxu0 %v506
        %v670 = vpop.f32.mrb[0].mxu0
        %v671 = vadd.f32 0.0, %v670
        %v672 = vpop.f32.mrb[0].mxu0
        %v673 = vadd.f32 0.0, %v672
        %v674 = vpop.f32.mrb[0].mxu0
        %v675 = vadd.f32 0.0, %v674
        %v676 = vpop.f32.mrb[0].mxu0
        %v677 = vadd.f32 0.0, %v676
        %678 = vmatprep.mubr.bf16.mxu0 0
        %679 = vmatmul.mubr.bf16.gmra.mrb[0].mxu0 %v507
        %v680 = vpop.f32.mrb[0].mxu0
        %v681 = vadd.f32 0.0, %v680
        %v682 = vpop.f32.mrb[0].mxu0
        %v683 = vadd.f32 0.0, %v682
        %v684 = vpop.f32.mrb[0].mxu0
        %v685 = vadd.f32 0.0, %v684
        %v686 = vpop.f32.mrb[0].mxu0
        %v687 = vadd.f32 0.0, %v686
        %688 = vmatprep.mubr.bf16.mxu0 0
        %689 = vmatmul.mubr.bf16.gmra.mrb[0].mxu0 %v508
        %v690 = vpop.f32.mrb[0].mxu0
        %v691 = vadd.f32 0.0, %v690
        %v692 = vpop.f32.mrb[0].mxu0
        %v693 = vadd.f32 0.0, %v692
        %v694 = vpop.f32.mrb[0].mxu0
        %v695 = vadd.f32 0.0, %v694
        %v696 = vpop.f32.mrb[0].mxu0
        %v697 = vadd.f32 0.0, %v696
        %698 = vmatprep.mubr.bf16.mxu0 0
        %699 = vmatmul.mubr.bf16.gmra.mrb[0].mxu0 %v509
        %v700 = vpop.f32.mrb[0].mxu0
        %v701 = vadd.f32 0.0, %v700
        %v702 = vpop.f32.mrb[0].mxu0
        %v703 = vadd.f32 0.0, %v702
        %v704 = vpop.f32.mrb[0].mxu0
        %v705 = vadd.f32 0.0, %v704
        %v706 = vpop.f32.mrb[0].mxu0
        %v707 = vadd.f32 0.0, %v706
        %708 = vmatprep.mubr.bf16.mxu0 0
        %709 = vmatmul.mubr.bf16.gmra.mrb[0].mxu0 %v510
        %v710 = vpop.f32.mrb[0].mxu0
        %v711 = vadd.f32 0.0, %v710
        %v712 = vpop.f32.mrb[0].mxu0
        %v713 = vadd.f32 0.0, %v712
        %v714 = vpop.f32.mrb[0].mxu0
        %v715 = vadd.f32 0.0, %v714
        %v716 = vpop.f32.mrb[0].mxu0
        %v717 = vadd.f32 0.0, %v716
        %718 = vmatprep.mubr.bf16.mxu0 0
        %719 = vmatmul.mubr.bf16.gmra.mrb[0].mxu0 %v511
        %v720 = vpop.f32.mrb[0].mxu0
        %v721 = vadd.f32 0.0, %v720
        %v722 = vpop.f32.mrb[0].mxu0
        %v723 = vadd.f32 0.0, %v722
        %v724 = vpop.f32.mrb[0].mxu0
        %v725 = vadd.f32 0.0, %v724
        %v726 = vpop.f32.mrb[0].mxu0
        %v727 = vadd.f32 0.0, %v726
        %728 = vmatprep.mubr.bf16.mxu0 0
        %729 = vmatmul.mubr.bf16.gmra.mrb[0].mxu0 %v512
        %v730 = vpop.f32.mrb[0].mxu0
        %v731 = vadd.f32 0.0, %v730
        %v732 = vpop.f32.mrb[0].mxu0
        %v733 = vadd.f32 0.0, %v732
        %v734 = vpop.f32.mrb[0].mxu0
        %v735 = vadd.f32 0.0, %v734
        %v736 = vpop.f32.mrb[0].mxu0
        %v737 = vadd.f32 0.0, %v736
        %738 = vmatprep.mubr.bf16.mxu0 0
        %739 = vmatmul.mubr.bf16.gmra.mrb[0].mxu0 %v513
        %v740 = vpop.f32.mrb[0].mxu0
        %v741 = vadd.f32 0.0, %v740
        %v742 = vpop.f32.mrb[0].mxu0
        %v743 = vadd.f32 0.0, %v742
        %v744 = vpop.f32.mrb[0].mxu0
        %v745 = vadd.f32 0.0, %v744
        %v746 = vpop.f32.mrb[0].mxu0
        %v747 = vadd.f32 0.0, %v746
        %748 = vmatprep.mubr.bf16.mxu0 0
        %749 = vmatmul.mubr.bf16.gmra.mrb[0].mxu0 %v514
        %v750 = vpop.f32.mrb[0].mxu0
        %v751 = vadd.f32 0.0, %v750
        %v752 = vpop.f32.mrb[0].mxu0
        %v753 = vadd.f32 0.0, %v752
        %v754 = vpop.f32.mrb[0].mxu0
        %v755 = vadd.f32 0.0, %v754
        %v756 = vpop.f32.mrb[0].mxu0
        %v757 = vadd.f32 0.0, %v756
        %758 = vmatprep.mubr.bf16.mxu0 0
        %759 = vmatmul.mubr.bf16.gmra.mrb[0].mxu0 %v515
        %v760 = vpop.f32.mrb[0].mxu0
        %v761 = vadd.f32 0.0, %v760
        %v762 = vpop.f32.mrb[0].mxu0
        %v763 = vadd.f32 0.0, %v762
        %v764 = vpop.f32.mrb[0].mxu0
        %v765 = vadd.f32 0.0, %v764
        %v766 = vpop.f32.mrb[0].mxu0
        %v767 = vadd.f32 0.0, %v766
        %768 = vmatprep.mubr.bf16.mxu0 0
        %769 = vmatmul.mubr.bf16.gmra.mrb[0].mxu0 %v516
        %v770 = vpop.f32.mrb[0].mxu0
        %v771 = vadd.f32 0.0, %v770
        %v772 = vpop.f32.mrb[0].mxu0
        %v773 = vadd.f32 0.0, %v772
        %v774 = vpop.f32.mrb[0].mxu0
        %v775 = vadd.f32 0.0, %v774
        %v776 = vpop.f32.mrb[0].mxu0
        %v777 = vadd.f32 0.0, %v776
        %778 = vmatprep.mubr.bf16.mxu0 0
        %779 = vmatmul.mubr.bf16.gmra.mrb[0].mxu0 %v517
        %v780 = vpop.f32.mrb[0].mxu0
        %v781 = vadd.f32 0.0, %v780
        %v782 = vpop.f32.mrb[0].mxu0
        %v783 = vadd.f32 0.0, %v782
        %v784 = vpop.f32.mrb[0].mxu0
        %v785 = vadd.f32 0.0, %v784
        %v786 = vpop.f32.mrb[0].mxu0
        %v787 = vadd.f32 0.0, %v786
        %788 = vmatprep.mubr.bf16.mxu0 0
        %789 = vmatmul.mubr.bf16.gmra.mrb[0].mxu0 %v518
        %v790 = vpop.f32.mrb[0].mxu0
        %v791 = vadd.f32 0.0, %v790
        %v792 = vpop.f32.mrb[0].mxu0
        %v793 = vadd.f32 0.0, %v792
        %v794 = vpop.f32.mrb[0].mxu0
        %v795 = vadd.f32 0.0, %v794
        %v796 = vpop.f32.mrb[0].mxu0
        %v797 = vadd.f32 0.0, %v796
        %798 = vmatprep.mubr.bf16.mxu0 0
        %799 = vmatmul.mubr.bf16.gmra.mrb[0].mxu0 %v519
        %v800 = vpop.f32.mrb[0].mxu0
        %v801 = vadd.f32 0.0, %v800
        %v802 = vpop.f32.mrb[0].mxu0
        %v803 = vadd.f32 0.0, %v802
        %v804 = vpop.f32.mrb[0].mxu0
        %v805 = vadd.f32 0.0, %v804
        %v806 = vpop.f32.mrb[0].mxu0
        %v807 = vadd.f32 0.0, %v806
        %808 = vdwg.mxu0
        %v809 = vpack.c.bf16 %v657, %v653
        %v810 = vpack.c.bf16 %v667, %v663
        %v811 = vpack.c.bf16 %v677, %v673
        %v812 = vpack.c.bf16 %v687, %v683
        %v813 = vpack.c.bf16 %v697, %v693
        %v814 = vpack.c.bf16 %v707, %v703
        %v815 = vpack.c.bf16 %v717, %v713
        %v816 = vpack.c.bf16 %v727, %v723
        %v817 = vpack.c.bf16 %v737, %v733
        %v818 = vpack.c.bf16 %v747, %v743
        %v819 = vpack.c.bf16 %v757, %v753
        %v820 = vpack.c.bf16 %v767, %v763
        %v821 = vpack.c.bf16 %v777, %v773
        %v822 = vpack.c.bf16 %v787, %v783
        %v823 = vpack.c.bf16 %v797, %v793
        %v824 = vpack.c.bf16 %v807, %v803
        %v825 = vpack.c.bf16 %v655, %v651
        %v826 = vpack.c.bf16 %v665, %v661
        %v827 = vpack.c.bf16 %v675, %v671
        %v828 = vpack.c.bf16 %v685, %v681
        %v829 = vpack.c.bf16 %v695, %v691
        %v830 = vpack.c.bf16 %v705, %v701
        %v831 = vpack.c.bf16 %v715, %v711
        %v832 = vpack.c.bf16 %v725, %v721
        %v833 = vpack.c.bf16 %v735, %v731
        %v834 = vpack.c.bf16 %v745, %v741
        %v835 = vpack.c.bf16 %v755, %v751
        %v836 = vpack.c.bf16 %v765, %v761
        %v837 = vpack.c.bf16 %v775, %v771
        %v838 = vpack.c.bf16 %v785, %v781
        %v839 = vpack.c.bf16 %v795, %v791
        %v840 = vpack.c.bf16 %v805, %v801
        %v841 = vunpack.c.l.bf16 %v825
        %v842 = vunpack.c.h.bf16 %v825
        %v843 = vunpack.c.l.bf16 %v826
        %v844 = vunpack.c.h.bf16 %v826
        %v845 = vunpack.c.l.bf16 %v827
        %v846 = vunpack.c.h.bf16 %v827
        %v847 = vunpack.c.l.bf16 %v828
        %v848 = vunpack.c.h.bf16 %v828
        %v849 = vunpack.c.l.bf16 %v829
        %v850 = vunpack.c.h.bf16 %v829
        %v851 = vunpack.c.l.bf16 %v830
        %v852 = vunpack.c.h.bf16 %v830
        %v853 = vunpack.c.l.bf16 %v831
        %v854 = vunpack.c.h.bf16 %v831
        %v855 = vunpack.c.l.bf16 %v832
        %v856 = vunpack.c.h.bf16 %v832
        %v857 = vunpack.c.l.bf16 %v833
        %v858 = vunpack.c.h.bf16 %v833
        %v859 = vunpack.c.l.bf16 %v834
        %v860 = vunpack.c.h.bf16 %v834
        %v861 = vunpack.c.l.bf16 %v835
        %v862 = vunpack.c.h.bf16 %v835
        %v863 = vunpack.c.l.bf16 %v836
        %v864 = vunpack.c.h.bf16 %v836
        %v865 = vunpack.c.l.bf16 %v837
        %v866 = vunpack.c.h.bf16 %v837
        %v867 = vunpack.c.l.bf16 %v838
        %v868 = vunpack.c.h.bf16 %v838
        %v869 = vunpack.c.l.bf16 %v839
        %v870 = vunpack.c.h.bf16 %v839
        %v871 = vunpack.c.l.bf16 %v840
        %v872 = vunpack.c.h.bf16 %v840
        %v873 = vadd.f32 %v841, %v842
        %v874 = vadd.f32 %v873, %v843
        %v875 = vadd.f32 %v874, %v844
        %v876 = vadd.f32 %v875, %v845
        %v877 = vadd.f32 %v876, %v846
        %v878 = vadd.f32 %v877, %v847
        %v879 = vadd.f32 %v878, %v848
        %v880 = vadd.f32 %v879, %v849
        %v881 = vadd.f32 %v880, %v850
        %v882 = vadd.f32 %v881, %v851
        %v883 = vadd.f32 %v882, %v852
        %v884 = vadd.f32 %v883, %v853
        %v885 = vadd.f32 %v884, %v854
        %v886 = vadd.f32 %v885, %v855
        %v887 = vadd.f32 %v886, %v856
        %v888 = vadd.f32 %v887, %v857
        %v889 = vadd.f32 %v888, %v858
        %v890 = vadd.f32 %v889, %v859
        %v891 = vadd.f32 %v890, %v860
        %v892 = vadd.f32 %v891, %v861
        %v893 = vadd.f32 %v892, %v862
        %v894 = vadd.f32 %v893, %v863
        %v895 = vadd.f32 %v894, %v864
        %v896 = vadd.f32 %v895, %v865
        %v897 = vadd.f32 %v896, %v866
        %v898 = vadd.f32 %v897, %v867
        %v899 = vadd.f32 %v898, %v868
        %v900 = vadd.f32 %v899, %v869
        %v901 = vadd.f32 %v900, %v870
        %v902 = vadd.f32 %v901, %v871
        %v903 = vadd.f32 %v902, %v872
        %v904 = vrot.slane %v903, 4
        %v905 = vadd.f32 %v903, %v904
        %v906 = vrot.slane %v905, 2
        %v907 = vadd.f32 %v905, %v906
        %v908 = vrot.slane %v907, 1
        %v909 = vadd.f32 %v907, %v908
        %v910 = vmul.f32 %v841, %v841
        %v911 = vmul.f32 %v842, %v842
        %v912 = vmul.f32 %v843, %v843
        %v913 = vmul.f32 %v844, %v844
        %v914 = vmul.f32 %v845, %v845
        %v915 = vmul.f32 %v846, %v846
        %v916 = vmul.f32 %v847, %v847
        %v917 = vmul.f32 %v848, %v848
        %v918 = vmul.f32 %v849, %v849
        %v919 = vmul.f32 %v850, %v850
        %v920 = vmul.f32 %v851, %v851
        %v921 = vmul.f32 %v852, %v852
        %v922 = vmul.f32 %v853, %v853
        %v923 = vmul.f32 %v854, %v854
        %v924 = vmul.f32 %v855, %v855
        %v925 = vmul.f32 %v856, %v856
        %v926 = vmul.f32 %v857, %v857
        %v927 = vmul.f32 %v858, %v858
        %v928 = vmul.f32 %v859, %v859
        %v929 = vmul.f32 %v860, %v860
        %v930 = vmul.f32 %v861, %v861
        %v931 = vmul.f32 %v862, %v862
        %v932 = vmul.f32 %v863, %v863
        %v933 = vmul.f32 %v864, %v864
        %v934 = vmul.f32 %v865, %v865
        %v935 = vmul.f32 %v866, %v866
        %v936 = vmul.f32 %v867, %v867
        %v937 = vmul.f32 %v868, %v868
        %v938 = vmul.f32 %v869, %v869
        %v939 = vmul.f32 %v870, %v870
        %v940 = vmul.f32 %v871, %v871
        %v941 = vmul.f32 %v872, %v872
        %v942 = vadd.f32 %v910, %v911
        %v943 = vadd.f32 %v942, %v912
        %v944 = vadd.f32 %v943, %v913
        %v945 = vadd.f32 %v944, %v914
        %v946 = vadd.f32 %v945, %v915
        %v947 = vadd.f32 %v946, %v916
        %v948 = vadd.f32 %v947, %v917
        %v949 = vadd.f32 %v948, %v918
        %v950 = vadd.f32 %v949, %v919
        %v951 = vadd.f32 %v950, %v920
        %v952 = vadd.f32 %v951, %v921
        %v953 = vadd.f32 %v952, %v922
        %v954 = vadd.f32 %v953, %v923
        %v955 = vadd.f32 %v954, %v924
        %v956 = vadd.f32 %v955, %v925
        %v957 = vadd.f32 %v956, %v926
        %v958 = vadd.f32 %v957, %v927
        %v959 = vadd.f32 %v958, %v928
        %v960 = vadd.f32 %v959, %v929
        %v961 = vadd.f32 %v960, %v930
        %v962 = vadd.f32 %v961, %v931
        %v963 = vadd.f32 %v962, %v932
        %v964 = vadd.f32 %v963, %v933
        %v965 = vadd.f32 %v964, %v934
        %v966 = vadd.f32 %v965, %v935
        %v967 = vadd.f32 %v966, %v936
        %v968 = vadd.f32 %v967, %v937
        %v969 = vadd.f32 %v968, %v938
        %v970 = vadd.f32 %v969, %v939
        %v971 = vadd.f32 %v970, %v940
        %v972 = vadd.f32 %v971, %v941
        %v973 = vrot.slane %v972, 4
        %v974 = vadd.f32 %v972, %v973
        %v975 = vrot.slane %v974, 2
        %v976 = vadd.f32 %v974, %v975
        %v977 = vrot.slane %v976, 1
        %v978 = vadd.f32 %v976, %v977
        %vm979 = vcmask 1040384
        %v980 = vsel %vm979, %v909, %v978
        %981 = vst [vmem:[%s325] sm:$0x3] %v980
        %v998 = vunpack.c.l.b16 %v825
        %v999 = vunpack.c.h.b16 %v825
        %v1000 = vunpack.c.l.b16 %v826
        %v1001 = vunpack.c.h.b16 %v826
        %v1002 = vunpack.c.l.b16 %v827
        %v1003 = vunpack.c.h.b16 %v827
        %v1004 = vunpack.c.l.b16 %v828
        %v1005 = vunpack.c.h.b16 %v828
        %v1006 = vunpack.c.l.b16 %v829
        %v1007 = vunpack.c.h.b16 %v829
        %v1008 = vunpack.c.l.b16 %v830
        %v1009 = vunpack.c.h.b16 %v830
        %v1010 = vunpack.c.l.b16 %v831
        %v1011 = vunpack.c.h.b16 %v831
        %v1012 = vunpack.c.l.b16 %v832
        %v1013 = vunpack.c.h.b16 %v832
        %v1014 = vunpack.c.l.b16 %v833
        %v1015 = vunpack.c.h.b16 %v833
        %v1016 = vunpack.c.l.b16 %v834
        %v1017 = vunpack.c.h.b16 %v834
        %v1018 = vunpack.c.l.b16 %v835
        %v1019 = vunpack.c.h.b16 %v835
        %v1020 = vunpack.c.l.b16 %v836
        %v1021 = vunpack.c.h.b16 %v836
        %v1022 = vunpack.c.l.b16 %v837
        %v1023 = vunpack.c.h.b16 %v837
        %v1024 = vunpack.c.l.b16 %v838
        %v1025 = vunpack.c.h.b16 %v838
        %v1026 = vunpack.c.l.b16 %v839
        %v1027 = vunpack.c.h.b16 %v839
        %v1028 = vunpack.c.l.b16 %v840
        %v1029 = vunpack.c.h.b16 %v840
        %v1030 = vpack.c.b16 %v998, %v998
        %v1031 = vpack.c.b16 %v999, %v999
        %v1032 = vpack.c.b16 %v1000, %v1000
        %v1033 = vpack.c.b16 %v1001, %v1001
        %v1034 = vpack.c.b16 %v1002, %v1002
        %v1035 = vpack.c.b16 %v1003, %v1003
        %v1036 = vpack.c.b16 %v1004, %v1004
        %v1037 = vpack.c.b16 %v1005, %v1005
        %v1038 = vpack.c.b16 %v1006, %v1006
        %v1039 = vpack.c.b16 %v1007, %v1007
        %v1040 = vpack.c.b16 %v1008, %v1008
        %v1041 = vpack.c.b16 %v1009, %v1009
        %v1042 = vpack.c.b16 %v1010, %v1010
        %v1043 = vpack.c.b16 %v1011, %v1011
        %v1044 = vpack.c.b16 %v1012, %v1012
        %v1045 = vpack.c.b16 %v1013, %v1013
        %v1046 = vpack.c.b16 %v1014, %v1014
        %v1047 = vpack.c.b16 %v1015, %v1015
        %v1048 = vpack.c.b16 %v1016, %v1016
        %v1049 = vpack.c.b16 %v1017, %v1017
        %v1050 = vpack.c.b16 %v1018, %v1018
        %v1051 = vpack.c.b16 %v1019, %v1019
        %v1052 = vpack.c.b16 %v1020, %v1020
        %v1053 = vpack.c.b16 %v1021, %v1021
        %v1054 = vpack.c.b16 %v1022, %v1022
        %v1055 = vpack.c.b16 %v1023, %v1023
        %v1056 = vpack.c.b16 %v1024, %v1024
        %v1057 = vpack.c.b16 %v1025, %v1025
        %v1058 = vpack.c.b16 %v1026, %v1026
        %v1059 = vpack.c.b16 %v1027, %v1027
        %v1060 = vpack.c.b16 %v1028, %v1028
        %v1061 = vpack.c.b16 %v1029, %v1029
        %1094 = vst [vmem:[%s311] sm:$0xf] %v1030
        %1095 = vst [vmem:[%s311 + $0x4] sm:$0xf] %v1031
        %1096 = vst [vmem:[%s311 + $0x8] sm:$0xf] %v1032
        %1097 = vst [vmem:[%s311 + $0xc] sm:$0xf] %v1033
        %1098 = vst [vmem:[%s311 + $0x10] sm:$0xf] %v1034
        %1099 = vst [vmem:[%s311 + $0x14] sm:$0xf] %v1035
        %1100 = vst [vmem:[%s311 + $0x18] sm:$0xf] %v1036
        %1101 = vst [vmem:[%s311 + $0x1c] sm:$0xf] %v1037
        %1102 = vst [vmem:[%s311 + $0x20] sm:$0xf] %v1038
        %1103 = vst [vmem:[%s311 + $0x24] sm:$0xf] %v1039
        %1104 = vst [vmem:[%s311 + $0x28] sm:$0xf] %v1040
        %1105 = vst [vmem:[%s311 + $0x2c] sm:$0xf] %v1041
        %1106 = vst [vmem:[%s311 + $0x30] sm:$0xf] %v1042
        %1107 = vst [vmem:[%s311 + $0x34] sm:$0xf] %v1043
        %1108 = vst [vmem:[%s311 + $0x38] sm:$0xf] %v1044
        %1109 = vst [vmem:[%s311 + $0x3c] sm:$0xf] %v1045
        %1110 = vst [vmem:[%s311 + $0x40] sm:$0xf] %v1046
        %1111 = vst [vmem:[%s311 + $0x44] sm:$0xf] %v1047
        %1112 = vst [vmem:[%s311 + $0x48] sm:$0xf] %v1048
        %1113 = vst [vmem:[%s311 + $0x4c] sm:$0xf] %v1049
        %1114 = vst [vmem:[%s311 + $0x50] sm:$0xf] %v1050
        %1115 = vst [vmem:[%s311 + $0x54] sm:$0xf] %v1051
        %1116 = vst [vmem:[%s311 + $0x58] sm:$0xf] %v1052
        %1117 = vst [vmem:[%s311 + $0x5c] sm:$0xf] %v1053
        %1118 = vst [vmem:[%s311 + $0x60] sm:$0xf] %v1054
        %1119 = vst [vmem:[%s311 + $0x64] sm:$0xf] %v1055
        %1120 = vst [vmem:[%s311 + $0x68] sm:$0xf] %v1056
        %1121 = vst [vmem:[%s311 + $0x6c] sm:$0xf] %v1057
        %1122 = vst [vmem:[%s311 + $0x70] sm:$0xf] %v1058
        %1123 = vst [vmem:[%s311 + $0x74] sm:$0xf] %v1059
        %1124 = vst [vmem:[%s311 + $0x78] sm:$0xf] %v1060
        %1125 = vst [vmem:[%s311 + $0x7c] sm:$0xf] %v1061
        %v1142 = vunpack.c.l.b16 %v809
        %v1143 = vunpack.c.h.b16 %v809
        %v1144 = vunpack.c.l.b16 %v810
        %v1145 = vunpack.c.h.b16 %v810
        %v1146 = vunpack.c.l.b16 %v811
        %v1147 = vunpack.c.h.b16 %v811
        %v1148 = vunpack.c.l.b16 %v812
        %v1149 = vunpack.c.h.b16 %v812
        %v1150 = vunpack.c.l.b16 %v813
        %v1151 = vunpack.c.h.b16 %v813
        %v1152 = vunpack.c.l.b16 %v814
        %v1153 = vunpack.c.h.b16 %v814
        %v1154 = vunpack.c.l.b16 %v815
        %v1155 = vunpack.c.h.b16 %v815
        %v1156 = vunpack.c.l.b16 %v816
        %v1157 = vunpack.c.h.b16 %v816
        %v1158 = vunpack.c.l.b16 %v817
        %v1159 = vunpack.c.h.b16 %v817
        %v1160 = vunpack.c.l.b16 %v818
        %v1161 = vunpack.c.h.b16 %v818
        %v1162 = vunpack.c.l.b16 %v819
        %v1163 = vunpack.c.h.b16 %v819
        %v1164 = vunpack.c.l.b16 %v820
        %v1165 = vunpack.c.h.b16 %v820
        %v1166 = vunpack.c.l.b16 %v821
        %v1167 = vunpack.c.h.b16 %v821
        %v1168 = vunpack.c.l.b16 %v822
        %v1169 = vunpack.c.h.b16 %v822
        %v1170 = vunpack.c.l.b16 %v823
        %v1171 = vunpack.c.h.b16 %v823
        %v1172 = vunpack.c.l.b16 %v824
        %v1173 = vunpack.c.h.b16 %v824
        %v1174 = vpack.c.b16 %v1142, %v1142
        %v1175 = vpack.c.b16 %v1143, %v1143
        %v1176 = vpack.c.b16 %v1144, %v1144
        %v1177 = vpack.c.b16 %v1145, %v1145
        %v1178 = vpack.c.b16 %v1146, %v1146
        %v1179 = vpack.c.b16 %v1147, %v1147
        %v1180 = vpack.c.b16 %v1148, %v1148
        %v1181 = vpack.c.b16 %v1149, %v1149
        %v1182 = vpack.c.b16 %v1150, %v1150
        %v1183 = vpack.c.b16 %v1151, %v1151
        %v1184 = vpack.c.b16 %v1152, %v1152
        %v1185 = vpack.c.b16 %v1153, %v1153
        %v1186 = vpack.c.b16 %v1154, %v1154
        %v1187 = vpack.c.b16 %v1155, %v1155
        %v1188 = vpack.c.b16 %v1156, %v1156
        %v1189 = vpack.c.b16 %v1157, %v1157
        %v1190 = vpack.c.b16 %v1158, %v1158
        %v1191 = vpack.c.b16 %v1159, %v1159
        %v1192 = vpack.c.b16 %v1160, %v1160
        %v1193 = vpack.c.b16 %v1161, %v1161
        %v1194 = vpack.c.b16 %v1162, %v1162
        %v1195 = vpack.c.b16 %v1163, %v1163
        %v1196 = vpack.c.b16 %v1164, %v1164
        %v1197 = vpack.c.b16 %v1165, %v1165
        %v1198 = vpack.c.b16 %v1166, %v1166
        %v1199 = vpack.c.b16 %v1167, %v1167
        %v1200 = vpack.c.b16 %v1168, %v1168
        %v1201 = vpack.c.b16 %v1169, %v1169
        %v1202 = vpack.c.b16 %v1170, %v1170
        %v1203 = vpack.c.b16 %v1171, %v1171
        %v1204 = vpack.c.b16 %v1172, %v1172
        %v1205 = vpack.c.b16 %v1173, %v1173
        %1238 = vst [vmem:[%s318] sm:$0xf] %v1174
        %1239 = vst [vmem:[%s318 + $0x4] sm:$0xf] %v1175
        %1240 = vst [vmem:[%s318 + $0x8] sm:$0xf] %v1176
        %1241 = vst [vmem:[%s318 + $0xc] sm:$0xf] %v1177
        %1242 = vst [vmem:[%s318 + $0x10] sm:$0xf] %v1178
        %1243 = vst [vmem:[%s318 + $0x14] sm:$0xf] %v1179
        %1244 = vst [vmem:[%s318 + $0x18] sm:$0xf] %v1180
        %1245 = vst [vmem:[%s318 + $0x1c] sm:$0xf] %v1181
        %1246 = vst [vmem:[%s318 + $0x20] sm:$0xf] %v1182
        %1247 = vst [vmem:[%s318 + $0x24] sm:$0xf] %v1183
        %1248 = vst [vmem:[%s318 + $0x28] sm:$0xf] %v1184
        %1249 = vst [vmem:[%s318 + $0x2c] sm:$0xf] %v1185
        %1250 = vst [vmem:[%s318 + $0x30] sm:$0xf] %v1186
        %1251 = vst [vmem:[%s318 + $0x34] sm:$0xf] %v1187
        %1252 = vst [vmem:[%s318 + $0x38] sm:$0xf] %v1188
        %1253 = vst [vmem:[%s318 + $0x3c] sm:$0xf] %v1189
        %1254 = vst [vmem:[%s318 + $0x40] sm:$0xf] %v1190
        %1255 = vst [vmem:[%s318 + $0x44] sm:$0xf] %v1191
        %1256 = vst [vmem:[%s318 + $0x48] sm:$0xf] %v1192
        %1257 = vst [vmem:[%s318 + $0x4c] sm:$0xf] %v1193
        %1258 = vst [vmem:[%s318 + $0x50] sm:$0xf] %v1194
        %1259 = vst [vmem:[%s318 + $0x54] sm:$0xf] %v1195
        %1260 = vst [vmem:[%s318 + $0x58] sm:$0xf] %v1196
        %1261 = vst [vmem:[%s318 + $0x5c] sm:$0xf] %v1197
        %1262 = vst [vmem:[%s318 + $0x60] sm:$0xf] %v1198
        %1263 = vst [vmem:[%s318 + $0x64] sm:$0xf] %v1199
        %1264 = vst [vmem:[%s318 + $0x68] sm:$0xf] %v1200
        %1265 = vst [vmem:[%s318 + $0x6c] sm:$0xf] %v1201
        %1266 = vst [vmem:[%s318 + $0x70] sm:$0xf] %v1202
        %1267 = vst [vmem:[%s318 + $0x74] sm:$0xf] %v1203
        %1268 = vst [vmem:[%s318 + $0x78] sm:$0xf] %v1204
        %1269 = vst [vmem:[%s318 + $0x7c] sm:$0xf] %v1205
        %s1270 = sand.u32 %s141, 1
        %s1271 = scalar_lea.sflag [#allocation4], %s1270
        %s1272 = sand.u32 %s141, 1
        %s1273 = smul.addr %s1272, 128
        %s1274 = scalar_lea.vmem [#allocation7], %s1273
        %s1275 = sand.u32 %s28, 1
        %s1276 = scalar_lea.sflag [#allocation9], %s1275
        %s1277 = sand.u32 %s169, 1
        %s1278 = smul.addr %s1277, 128
        %s1279 = scalar_lea.vmem [#allocation8], %s1278
        %s1280 = sand.u32 %s28, 1
        %s1281 = scalar_lea.sflag [#allocation9], %s1280
        %s1282 = sand.u32 %s197, 1
        %s1283 = smul.addr %s1282, 2
        %s1284 = scalar_lea.vmem [#allocation10], %s1283
        // Predicated region
        $region45: #{tpu_custom_call.1} parent=35 // pred_check
          %p1285 = pneg %p151
        $region46: #{tpu_custom_call.1} parent=35 // pred_check_branch
          %1287 = sbr.rel (%p1285) target = $region48
        $region47: #{tpu_custom_call.1} parent=35 // pred_region
          %s1288 = smul.u32 16, %s33
          %s1290 = ssub.s32 2048, 2048
          %1291 = vsyncadd %s1271, %s1290
          %s1292 = smul.addr %s1288, 2
          %s1293 = smul.addr %s32, 32
          %s1294 = sadd.s32 %s1292, %s1293
          %s1295 = smul.addr %s1294, 64
          %s1296 = scalar_lea.hbm %s4, %s1295
          %s1297 = sshll.u32 %s1274, 4
          %s1298 = int_to_ptr.vmem [resolvable:$true] %s1297
          %1303 = dma.vmem_to_hbm [thread:$0]  %s1298, 2048, %s1296, %s1271, 64, 64, 4
        $region48: #{tpu_custom_call.1} parent=35 // pred_fallthru
          _
        // Predicated region
        $region49: #{tpu_custom_call.1} parent=35 // pred_check
          %p1304 = pneg %p179
        $region50: #{tpu_custom_call.1} parent=35 // pred_check_branch
          %1306 = sbr.rel (%p1304) target = $region52
        $region51: #{tpu_custom_call.1} parent=35 // pred_region
          %s1307 = smul.u32 16, %s33
          %s1309 = ssub.s32 2048, 2048
          %1310 = vsyncadd %s1276, %s1309
          %s1311 = smul.addr %s1307, 2
          %s1312 = smul.addr %s32, 32
          %s1313 = sadd.s32 %s1311, %s1312
          %s1314 = smul.addr %s1313, 64
          %s1315 = scalar_lea.hbm %s5, %s1314
          %s1316 = sshll.u32 %s1279, 4
          %s1317 = int_to_ptr.vmem [resolvable:$true] %s1316
          %1322 = dma.vmem_to_hbm [thread:$0]  %s1317, 2048, %s1315, %s1276, 64, 64, 4
        $region52: #{tpu_custom_call.1} parent=35 // pred_fallthru
          _
        // Predicated region
        $region53: #{tpu_custom_call.1} parent=35 // pred_check
          %p1323 = pneg %p207
        $region54: #{tpu_custom_call.1} parent=35 // pred_check_branch
          %1325 = sbr.rel (%p1323) target = $region56
        $region55: #{tpu_custom_call.1} parent=35 // pred_region
          %s1327 = ssub.s32 32, 32
          %1328 = vsyncadd %s1281, %s1327
          %s1329 = sadd.s32 %s33, %s32
          %s1330 = smul.addr %s1329, 32
          %s1331 = scalar_lea.hbm %s6, %s1330
          %s1333 = sshll.u32 %s1284, 4
          %s1334 = int_to_ptr.vmem [resolvable:$true] %s1333
          %1336 = dma.vmem_to_hbm [thread:$0]  %s1334, 32, %s1331, %s1281
        $region56: #{tpu_custom_call.1} parent=35 // pred_fallthru
          _
      $region36: #{tpu_custom_call.1} parent=5 // pred_fallthru
        _
      %p1337 = scmp.le.s32.totalorder 2, %s23
      // Predicated region
      $region57: #{tpu_custom_call.1} parent=5 // pred_check
        %p1338 = pneg %p1337
      $region58: #{tpu_custom_call.1} parent=5 // pred_check_branch
        %1340 = sbr.rel (%p1338) target = $region60
      $region59: #{tpu_custom_call.1} parent=5 // pred_region
        %s1341 = ssub.s32 %s23, 2
        // Predicated region
        $region61: #{tpu_custom_call.1} parent=59 // pred_check
          %p1342 = pneg %p157
        $region62: #{tpu_custom_call.1} parent=59 // pred_check_branch
          %1344 = sbr.rel (%p1342) target = $region64
        $region63: #{tpu_custom_call.1} parent=59 // pred_region
          %s1345 = sand.u32 %s142, 1
          %s1346 = scalar_lea.sflag [#allocation4], %s1345
          %s1347 = sand.u32 %s142, 1
          %s1348 = smul.addr %s1347, 128
          %s1349 = scalar_lea.vmem [#allocation7], %s1348
          %1350 = dma.done %s1346, 2048
        $region64: #{tpu_custom_call.1} parent=59 // pred_fallthru
          _
        // Predicated region
        $region65: #{tpu_custom_call.1} parent=59 // pred_check
          %p1351 = pneg %p185
        $region66: #{tpu_custom_call.1} parent=59 // pred_check_branch
          %1353 = sbr.rel (%p1351) target = $region68
        $region67: #{tpu_custom_call.1} parent=59 // pred_region
          %s1354 = sand.u32 %s29, 1
          %s1355 = scalar_lea.sflag [#allocation9], %s1354
          %s1356 = sand.u32 %s170, 1
          %s1357 = smul.addr %s1356, 128
          %s1358 = scalar_lea.vmem [#allocation8], %s1357
          %1359 = dma.done %s1355, 2048
        $region68: #{tpu_custom_call.1} parent=59 // pred_fallthru
          _
        // Predicated region
        $region69: #{tpu_custom_call.1} parent=59 // pred_check
          %p1360 = pneg %p213
        $region70: #{tpu_custom_call.1} parent=59 // pred_check_branch
          %1362 = sbr.rel (%p1360) target = $region72
        $region71: #{tpu_custom_call.1} parent=59 // pred_region
          %s1363 = sand.u32 %s29, 1
          %s1364 = scalar_lea.sflag [#allocation9], %s1363
          %s1365 = sand.u32 %s198, 1
          %s1366 = smul.addr %s1365, 2
          %s1367 = scalar_lea.vmem [#allocation10], %s1366
          %1368 = dma.done %s1364, 32
        $region72: #{tpu_custom_call.1} parent=59 // pred_fallthru
          _
      $region60: #{tpu_custom_call.1} parent=5 // pred_fallthru
        _
    $region6: #{tpu_custom_call.1} parent=1 // loop_footer
      %s27 = sadd.s32 1, %s23
    $region7: #{tpu_custom_call.1} parent=1 // loop_footer_branch
      %22 = sbr.rel target = $region3
    $region8: #{tpu_custom_call.1} parent=1 // loop_exit
      _
    %1369 = vsyncpa [#allocation3], 1
    %s1370 = scalar_lea.sflag [#allocation3], 1
    %1371 = vsyncpa %s1370, 1
    %1372 = vsyncpa [#allocation6], 1
    %1373 = vsyncpa [#allocation4], 1
    %s1374 = scalar_lea.sflag [#allocation4], 1
    %1375 = vsyncpa %s1374, 1
    %1376 = vsyncpa [#allocation9], 1
    %s1377 = scalar_lea.sflag [#allocation9], 1
    %1378 = vsyncpa %s1377, 1

</llo_original>
